<compile_context>
chip_gen: v7x
topology: tpu7x:2x2x1
jax: 0.10.0
libtpu: 0.0.40
codegen_flags: <defaults>
</compile_context>

<pallas_src>
from functools import partial

import numpy as np
import jax
import jax.numpy as jnp
from jax.experimental import pallas as pl
from jax.experimental.pallas import tpu as pltpu


def _dwconv_kernel(x_ref, w_ref, b_ref, ml_ref, mr_ref, mu_ref, md_ref, o_ref,
                   *, W):
    """One (rows, CB) block of the depthwise 3x3 conv on flattened tokens.

    x_ref : (rows, CB) activation rows (whole images, row-major H*W flattening)
    w_ref : (9, CB)    taps, t = 3*u + v  (u = kernel row, v = kernel col)
    b_ref : (1, CB)    bias
    m*_ref: (rows, 1)  {0,1} neighbour-validity masks (left/right/up/down)
    o_ref : (rows, CB)
    """
    rows = x_ref.shape[0]
    f32 = jnp.float32

    x = x_ref[...].astype(f32)
    w = w_ref[...].astype(f32)
    bias = b_ref[...].astype(f32)

    def wt(t):                         # (1, CB); sublane-broadcast over rows
        return w[t:t + 1, :]

    def shifted(v, offset, m_ref):
        # result[q] = v[q + offset] where that neighbour is inside the same
        # image, else 0.  The shift is a pltpu.roll (XLU slot); the rows the
        # circular roll drags across image/block boundaries are exactly the
        # rows the mask zeroes.
        s = (-offset) % rows           # canonical non-negative roll amount
        r = pltpu.roll(v, s, axis=0) if s else v
        return r * m_ref[...]          # (rows, 1) lane-broadcast multiply

    # Horizontal neighbours (within an image row); border columns -> 0.
    h_l = shifted(x, -1, ml_ref)       # value at (row, col-1)
    h_r = shifted(x, +1, mr_ref)       # value at (row, col+1)

    # Horizontal 1x3 convolution for each of the three kernel rows
    # (bias folded into the centre row's accumulator; two independent chains).
    g0 = wt(0) * h_l + wt(1) * x + wt(2) * h_r
    g1 = (bias + wt(3) * h_l) + (wt(4) * x + wt(5) * h_r)
    g2 = wt(6) * h_l + wt(7) * x + wt(8) * h_r

    # Vertical combine: pull g0 from the image row above and g2 from the row
    # below; image border rows -> 0.
    y = shifted(g0, -W, mu_ref) + g1 + shifted(g2, +W, md_ref)
    o_ref[...] = y.astype(o_ref.dtype)


def _pick_blocks(B, N, C_pad, itemsize, target_bytes):
    """Pick (channel_block, images_per_block) for ~target_bytes input blocks."""
    # Channel block: largest multiple of 128 dividing C_pad whose single-image
    # column still fits the target; never below 128 (stay lane-dense).
    cb = 128
    for cand in (512, 384, 256, 128):
        if C_pad % cand == 0 and (N * cand * itemsize <= target_bytes or cand == 128):
            cb = cand
            break
    # Images per block: largest divisor of B that keeps the block sublane
    # friendly (rows % 8 == 0, or the full row extent) and within the target.
    ipb = None
    for d in range(1, B + 1):
        if B % d:
            continue
        rows = d * N
        if rows % 8 and d != B:
            continue
        if ipb is None or rows * cb * itemsize <= target_bytes:
            ipb = d
    return cb, ipb
    # TODO(synk): for very large single images (N*128*itemsize >> target) tile
    # rows *within* an image with a +/-W halo instead of whole-image blocks.


def dwconv(x_tokens, H, W, w, b, *, block_target_bytes=1 << 20):
    """Depthwise 3x3 conv (stride 1, pad 1, groups == C) == DWConv.forward.

    x_tokens: (B, N=H*W, C)   w: (3, 3, C)   b: (C,)   ->   (B, N, C)
    """
    B, N, C = x_tokens.shape
    assert N == H * W, (N, H, W)

    w9 = w.reshape(9, C)
    b2 = b.reshape(1, C)

    # Lane-dense channels: pad C up to a multiple of 128 when needed (avoids
    # masked vst.msk partial stores); padded channels are sliced off at the end.
    C_pad = ((C + 127) // 128) * 128
    if C_pad != C:
        pad_c = C_pad - C
        x_tokens = jnp.pad(x_tokens, ((0, 0), (0, 0), (0, pad_c)))
        w9 = jnp.pad(w9, ((0, 0), (0, pad_c)))
        b2 = jnp.pad(b2, ((0, 0), (0, pad_c)))

    itemsize = np.dtype(x_tokens.dtype).itemsize
    CB, ipb = _pick_blocks(B, N, C_pad, itemsize, block_target_bytes)
    rows_blk = ipb * N
    n_cblk = C_pad // CB
    n_rblk = B // ipb

    # {0,1} border-validity masks per row position.  Every row block starts at
    # an image boundary and spans whole images, so one (rows_blk, 1) table
    # serves every block and stays resident in VMEM across all grid steps.
    q = np.arange(rows_blk)
    col = q % W
    pos = q % N
    m_l = (col != 0).astype(np.float32).reshape(rows_blk, 1)
    m_r = (col != W - 1).astype(np.float32).reshape(rows_blk, 1)
    m_u = (pos >= W).astype(np.float32).reshape(rows_blk, 1)
    m_d = (pos < N - W).astype(np.float32).reshape(rows_blk, 1)

    x2 = x_tokens.reshape(B * N, C_pad)            # free reshape (leading dims)
    mask_spec = pl.BlockSpec((rows_blk, 1), lambda ci, bi: (0, 0))

    out2 = pl.pallas_call(
        partial(_dwconv_kernel, W=W),
        out_shape=jax.ShapeDtypeStruct((B * N, C_pad), x_tokens.dtype),
        grid=(n_cblk, n_rblk),
        in_specs=[
            pl.BlockSpec((rows_blk, CB), lambda ci, bi: (bi, ci)),
            pl.BlockSpec((9, CB), lambda ci, bi: (0, ci)),
            pl.BlockSpec((1, CB), lambda ci, bi: (0, ci)),
            mask_spec, mask_spec, mask_spec, mask_spec,
        ],
        out_specs=pl.BlockSpec((rows_blk, CB), lambda ci, bi: (bi, ci)),
        compiler_params=pltpu.CompilerParams(
            dimension_semantics=("parallel", "parallel"),
            vmem_limit_bytes=48 * 1024 * 1024),
    )(x2, w9, b2, m_l, m_r, m_u, m_d)

    out = out2.reshape(B, N, C_pad)
    if C_pad != C:
        out = out[..., :C]
    return out


def _reference_dwconv(x_tokens, H, W, w, b):
    """Pure-JAX (XLA) reference: depthwise conv, groups == channels."""
    B, N, C = x_tokens.shape
    img = x_tokens.reshape(B, H, W, C)
    out = jax.lax.conv_general_dilated(
        img, w.reshape(3, 3, 1, C),
        window_strides=(1, 1), padding=((1, 1), (1, 1)),
        dimension_numbers=("NHWC", "HWIO", "NHWC"),
        feature_group_count=C)
    return (out + b).reshape(B, N, C)


def _check(B, H, W, C, key):
    N = H * W
    kx, kw, kb = jax.random.split(key, 3)
    x = jax.random.normal(kx, (B, N, C), jnp.float32)
    w = jax.random.normal(kw, (3, 3, C), jnp.float32) * (2.0 / 9.0) ** 0.5
    b = jax.random.normal(kb, (C,), jnp.float32) * 0.02

    fwd = jax.jit(lambda xx, ww, bb: dwconv(xx, H, W, ww, bb))
    out = fwd(x, w, b)
    jax.block_until_ready(out)

    ref = _reference_dwconv(x, w=w, b=b, H=H, W=W)
    assert out.shape == (B, N, C), out.shape
    assert bool(jnp.all(jnp.isfinite(out)))
    err = float(jnp.max(jnp.abs(out - ref)))
    assert bool(jnp.allclose(out, ref, atol=1e-4, rtol=1e-4)), err
    return err


if __name__ == "__main__":
    key = jax.random.PRNGKey(0)
    k1, k2 = jax.random.split(key)
    # Main shape: channels already a multiple of 128 (lane-dense path).
    _check(B=2, H=16, W=16, C=128, key=k1)
    # Robustness shape: non-square image, C not a multiple of 128 (padded path).
    _check(B=3, H=8, W=4, C=96, key=k2)
    print("KERNEL_OK")
</pallas_src>

<mosaic_0001>
module attributes {stable_mosaic.version = 11 : i64} {
  func.func @_dwconv_kernel(%arg0: i32, %arg1: i32, %arg2: memref<512x128xf32, #tpu.memory_space<vmem>>, %arg3: memref<9x128xf32, #tpu.memory_space<vmem>>, %arg4: memref<1x128xf32, #tpu.memory_space<vmem>>, %arg5: memref<512x1xf32, #tpu.memory_space<vmem>>, %arg6: memref<512x1xf32, #tpu.memory_space<vmem>>, %arg7: memref<512x1xf32, #tpu.memory_space<vmem>>, %arg8: memref<512x1xf32, #tpu.memory_space<vmem>>, %arg9: memref<512x128xf32, #tpu.memory_space<vmem>>) attributes {dimension_semantics = [#tpu.dimension_semantics<parallel>, #tpu.dimension_semantics<parallel>], iteration_bounds = array<i64: 1, 1>, scalar_prefetch = 0 : i64, scratch_operands = 0 : i64, tpu.core_type = #tpu.core_type<tc>, window_params = [{transform_indices = @transform_0, window_bounds = array<i64: 512, 128>}, {transform_indices = @transform_1, window_bounds = array<i64: 9, 128>}, {transform_indices = @transform_2, window_bounds = array<i64: 1, 128>}, {pipeline_mode = #tpu.pipeline_mode<synchronous>, transform_indices = @transform_3, window_bounds = array<i64: 512, 1>}, {pipeline_mode = #tpu.pipeline_mode<synchronous>, transform_indices = @transform_4, window_bounds = array<i64: 512, 1>}, {pipeline_mode = #tpu.pipeline_mode<synchronous>, transform_indices = @transform_5, window_bounds = array<i64: 512, 1>}, {pipeline_mode = #tpu.pipeline_mode<synchronous>, transform_indices = @transform_6, window_bounds = array<i64: 512, 1>}, {transform_indices = @transform_7, window_bounds = array<i64: 512, 128>}]} {
    %c0 = arith.constant 0 : index
    %c0_0 = arith.constant 0 : index
    %0 = vector.load %arg2[%c0, %c0_0] : memref<512x128xf32, #tpu.memory_space<vmem>>, vector<512x128xf32>
    %c0_1 = arith.constant 0 : index
    %c0_2 = arith.constant 0 : index
    %1 = vector.load %arg3[%c0_1, %c0_2] : memref<9x128xf32, #tpu.memory_space<vmem>>, vector<9x128xf32>
    %c0_3 = arith.constant 0 : index
    %c0_4 = arith.constant 0 : index
    %2 = vector.load %arg4[%c0_3, %c0_4] : memref<1x128xf32, #tpu.memory_space<vmem>>, vector<1x128xf32>
    %c1_i32 = arith.constant 1 : i32
    %3 = tpu.dynamic_rotate %0 by %c1_i32 dim 0 : vector<512x128xf32>, i32 -> vector<512x128xf32>
    %c0_5 = arith.constant 0 : index
    %c0_6 = arith.constant 0 : index
    %4 = vector.load %arg5[%c0_5, %c0_6] : memref<512x1xf32, #tpu.memory_space<vmem>>, vector<512x1xf32>
    %5 = vector.broadcast %4 : vector<512x1xf32> to vector<512x128xf32>
    %6 = arith.mulf %3, %5 : vector<512x128xf32>
    %c511_i32 = arith.constant 511 : i32
    %7 = tpu.dynamic_rotate %0 by %c511_i32 dim 0 : vector<512x128xf32>, i32 -> vector<512x128xf32>
    %c0_7 = arith.constant 0 : index
    %c0_8 = arith.constant 0 : index
    %8 = vector.load %arg6[%c0_7, %c0_8] : memref<512x1xf32, #tpu.memory_space<vmem>>, vector<512x1xf32>
    %9 = vector.broadcast %8 : vector<512x1xf32> to vector<512x128xf32>
    %10 = arith.mulf %7, %9 : vector<512x128xf32>
    %11 = vector.extract_strided_slice %1 {offsets = [0, 0], sizes = [1, 128], strides = [1, 1]} : vector<9x128xf32> to vector<1x128xf32>
    %12 = vector.broadcast %11 : vector<1x128xf32> to vector<512x128xf32>
    %13 = arith.mulf %12, %6 : vector<512x128xf32>
    %14 = vector.extract_strided_slice %1 {offsets = [1, 0], sizes = [1, 128], strides = [1, 1]} : vector<9x128xf32> to vector<1x128xf32>
    %15 = vector.broadcast %14 : vector<1x128xf32> to vector<512x128xf32>
    %16 = arith.mulf %15, %0 : vector<512x128xf32>
    %17 = arith.addf %13, %16 : vector<512x128xf32>
    %18 = vector.extract_strided_slice %1 {offsets = [2, 0], sizes = [1, 128], strides = [1, 1]} : vector<9x128xf32> to vector<1x128xf32>
    %19 = vector.broadcast %18 : vector<1x128xf32> to vector<512x128xf32>
    %20 = arith.mulf %19, %10 : vector<512x128xf32>
    %21 = arith.addf %17, %20 : vector<512x128xf32>
    %22 = vector.extract_strided_slice %1 {offsets = [3, 0], sizes = [1, 128], strides = [1, 1]} : vector<9x128xf32> to vector<1x128xf32>
    %23 = vector.broadcast %22 : vector<1x128xf32> to vector<512x128xf32>
    %24 = arith.mulf %23, %6 : vector<512x128xf32>
    %25 = vector.broadcast %2 : vector<1x128xf32> to vector<512x128xf32>
    %26 = arith.addf %25, %24 : vector<512x128xf32>
    %27 = vector.extract_strided_slice %1 {offsets = [4, 0], sizes = [1, 128], strides = [1, 1]} : vector<9x128xf32> to vector<1x128xf32>
    %28 = vector.broadcast %27 : vector<1x128xf32> to vector<512x128xf32>
    %29 = arith.mulf %28, %0 : vector<512x128xf32>
    %30 = vector.extract_strided_slice %1 {offsets = [5, 0], sizes = [1, 128], strides = [1, 1]} : vector<9x128xf32> to vector<1x128xf32>
    %31 = vector.broadcast %30 : vector<1x128xf32> to vector<512x128xf32>
    %32 = arith.mulf %31, %10 : vector<512x128xf32>
    %33 = arith.addf %29, %32 : vector<512x128xf32>
    %34 = arith.addf %26, %33 : vector<512x128xf32>
    %35 = vector.extract_strided_slice %1 {offsets = [6, 0], sizes = [1, 128], strides = [1, 1]} : vector<9x128xf32> to vector<1x128xf32>
    %36 = vector.broadcast %35 : vector<1x128xf32> to vector<512x128xf32>
    %37 = arith.mulf %36, %6 : vector<512x128xf32>
    %38 = vector.extract_strided_slice %1 {offsets = [7, 0], sizes = [1, 128], strides = [1, 1]} : vector<9x128xf32> to vector<1x128xf32>
    %39 = vector.broadcast %38 : vector<1x128xf32> to vector<512x128xf32>
    %40 = arith.mulf %39, %0 : vector<512x128xf32>
    %41 = arith.addf %37, %40 : vector<512x128xf32>
    %42 = vector.extract_strided_slice %1 {offsets = [8, 0], sizes = [1, 128], strides = [1, 1]} : vector<9x128xf32> to vector<1x128xf32>
    %43 = vector.broadcast %42 : vector<1x128xf32> to vector<512x128xf32>
    %44 = arith.mulf %43, %10 : vector<512x128xf32>
    %45 = arith.addf %41, %44 : vector<512x128xf32>
    %c16_i32 = arith.constant 16 : i32
    %46 = tpu.dynamic_rotate %21 by %c16_i32 dim 0 : vector<512x128xf32>, i32 -> vector<512x128xf32>
    %c0_9 = arith.constant 0 : index
    %c0_10 = arith.constant 0 : index
    %47 = vector.load %arg7[%c0_9, %c0_10] : memref<512x1xf32, #tpu.memory_space<vmem>>, vector<512x1xf32>
    %48 = vector.broadcast %47 : vector<512x1xf32> to vector<512x128xf32>
    %49 = arith.mulf %46, %48 : vector<512x128xf32>
    %50 = arith.addf %49, %34 : vector<512x128xf32>
    %c496_i32 = arith.constant 496 : i32
    %51 = tpu.dynamic_rotate %45 by %c496_i32 dim 0 : vector<512x128xf32>, i32 -> vector<512x128xf32>
    %c0_11 = arith.constant 0 : index
    %c0_12 = arith.constant 0 : index
    %52 = vector.load %arg8[%c0_11, %c0_12] : memref<512x1xf32, #tpu.memory_space<vmem>>, vector<512x1xf32>
    %53 = vector.broadcast %52 : vector<512x1xf32> to vector<512x128xf32>
    %54 = arith.mulf %51, %53 : vector<512x128xf32>
    %55 = arith.addf %50, %54 : vector<512x128xf32>
    %c0_13 = arith.constant 0 : index
    %c0_14 = arith.constant 0 : index
    %56 = vector.load %arg9[%c0_13, %c0_14] : memref<512x128xf32, #tpu.memory_space<vmem>>, vector<512x128xf32>
    tpu.vector_store %arg9[%c0_13, %c0_14], %55 {strides = array<i32>} : memref<512x128xf32, #tpu.memory_space<vmem>>, vector<512x128xf32>,
    return
  }
  func.func @transform_0(%arg0: i32, %arg1: i32) -> (i32, i32) {
    %c0_i32 = arith.constant 0 : i32
    return %arg1, %arg0 : i32, i32
  }
  func.func @transform_1(%arg0: i32, %arg1: i32) -> (i32, i32) {
    %c0_i32 = arith.constant 0 : i32
    %c0_i32_0 = arith.constant 0 : i32
    return %c0_i32, %arg0 : i32, i32
  }
  func.func @transform_2(%arg0: i32, %arg1: i32) -> (i32, i32) {
    %c0_i32 = arith.constant 0 : i32
    %c0_i32_0 = arith.constant 0 : i32
    return %c0_i32, %arg0 : i32, i32
  }
  func.func @transform_3(%arg0: i32, %arg1: i32) -> (i32, i32) {
    %c0_i32 = arith.constant 0 : i32
    %c0_i32_0 = arith.constant 0 : i32
    %c0_i32_1 = arith.constant 0 : i32
    return %c0_i32, %c0_i32_0 : i32, i32
  }
  func.func @transform_4(%arg0: i32, %arg1: i32) -> (i32, i32) {
    %c0_i32 = arith.constant 0 : i32
    %c0_i32_0 = arith.constant 0 : i32
    %c0_i32_1 = arith.constant 0 : i32
    return %c0_i32, %c0_i32_0 : i32, i32
  }
  func.func @transform_5(%arg0: i32, %arg1: i32) -> (i32, i32) {
    %c0_i32 = arith.constant 0 : i32
    %c0_i32_0 = arith.constant 0 : i32
    %c0_i32_1 = arith.constant 0 : i32
    return %c0_i32, %c0_i32_0 : i32, i32
  }
  func.func @transform_6(%arg0: i32, %arg1: i32) -> (i32, i32) {
    %c0_i32 = arith.constant 0 : i32
    %c0_i32_0 = arith.constant 0 : i32
    %c0_i32_1 = arith.constant 0 : i32
    return %c0_i32, %c0_i32_0 : i32, i32
  }
  func.func @transform_7(%arg0: i32, %arg1: i32) -> (i32, i32) {
    %c0_i32 = arith.constant 0 : i32
    return %arg1, %arg0 : i32, i32
  }
}

</mosaic_0001>

<llo_original>
// kernel: _lambda_.1
$region0: #{_lambda_.1}
  #allocation0 [shape = 'u32[]', space=smem, size = 0x4, offset = 0x4, fixed_abs, tag = 'smem constant byte address 0x4 - core index']
  #allocation1 [shape = 'u32[144,128]{1,0:T(1,128)}', space=vmem, size = 0x12000, scoped, tag = 'internal scratch']
  %s0 = inlined_call_operand.hbm [shape: f32[512,128], index: 0, kind: input, shape index: {}]
  %s1 = inlined_call_operand.vmem [shape: f32[9,128], index: 1, kind: input, shape index: {}]
  %s2 = inlined_call_operand.vmem [shape: f32[1,128], index: 2, kind: input, shape index: {}]
  %s3 = inlined_call_operand.hbm [shape: f32[512,1], index: 3, kind: input, shape index: {}]
  %s4 = inlined_call_operand.hbm [shape: f32[512,1], index: 4, kind: input, shape index: {}]
  %s5 = inlined_call_operand.hbm [shape: f32[512,1], index: 5, kind: input, shape index: {}]
  %s6 = inlined_call_operand.hbm [shape: f32[512,1], index: 6, kind: input, shape index: {}]
  %s7 = inlined_call_operand.hbm [shape: f32[512,128], index: 7, kind: output, shape index: {}]
  %s8 = sld [smem:[#allocation0]]
  $region58: #{_lambda_.1} parent=0
    _
  %s10 = ssub.s32 1, %s8
  %s11 = scalar_select 0, %s10, %s8
  $region1: #{_lambda_.1} parent=0
    #allocation2 [shape = 'u8[262144]{0}', space=vmem, size = 0x40000, scoped, tag = 'input window, operand 0, single buffered']
    #allocation3 [shape = 's32[1]{0}', space=sflag, size = 0x4, scoped, tag = 'scoped memory for _lambda_.1']
    #allocation4 [shape = 's32[1]{0}', space=sflag, size = 0x4, scoped, tag = 'scoped memory for _lambda_.1']
    #allocation5 [shape = 'u8[262144]{0}', space=vmem, size = 0x40000, scoped, tag = 'input window, operand 3, single buffered']
    #allocation6 [shape = 's32[1]{0}', space=sflag, size = 0x4, scoped, tag = 'scoped memory for _lambda_.1']
    #allocation7 [shape = 'u8[262144]{0}', space=vmem, size = 0x40000, scoped, tag = 'input window, operand 4, single buffered']
    #allocation8 [shape = 'u8[262144]{0}', space=vmem, size = 0x40000, scoped, tag = 'input window, operand 5, single buffered']
    #allocation9 [shape = 's32[1]{0}', space=sflag, size = 0x4, scoped, tag = 'scoped memory for _lambda_.1']
    #allocation10 [shape = 'u8[262144]{0}', space=vmem, size = 0x40000, scoped, tag = 'input window, operand 6, single buffered']
    #allocation11 [shape = 'u8[262144]{0}', space=vmem, size = 0x40000, scoped, tag = 'output window, operand 0, single buffered']
    %12 = vsyncpa [#allocation3], 0
    %13 = vsyncpa [#allocation6], 0
    %14 = vsyncpa [#allocation9], 0
    %15 = vsyncpa [#allocation4], 0
    // Predicated region
    $region2: #{_lambda_.1} parent=1 // pred_check
      _
    $region3: #{_lambda_.1} parent=1 // pred_check_branch
      %17 = sbr.rel (0) target = $region5
    $region4: #{_lambda_.1} parent=1 // pred_region
      %s19 = ssub.s32 8192, 8192
      %20 = vsyncadd [#allocation3], %s19
      %s21 = sshll.u32 [#allocation2], 4
      %s22 = int_to_ptr.vmem [resolvable:$true] %s21
      %27 = dma.hbm_to_vmem [thread:$0]  %s0, 8192, %s22, [#allocation3], 128, 128, 8
    $region5: #{_lambda_.1} parent=1 // pred_fallthru
      _
    // Predicated region
    $region6: #{_lambda_.1} parent=1 // pred_check
      _
    $region7: #{_lambda_.1} parent=1 // pred_check_branch
      %29 = sbr.rel (0) target = $region9
    $region8: #{_lambda_.1} parent=1 // pred_region
      _
    $region9: #{_lambda_.1} parent=1 // pred_fallthru
      _
    // Predicated region
    $region10: #{_lambda_.1} parent=1 // pred_check
      _
    $region11: #{_lambda_.1} parent=1 // pred_check_branch
      %31 = sbr.rel (0) target = $region13
    $region12: #{_lambda_.1} parent=1 // pred_region
      _
    $region13: #{_lambda_.1} parent=1 // pred_fallthru
      _
    // Predicated region
    $region14: #{_lambda_.1} parent=1 // pred_check
      _
    $region15: #{_lambda_.1} parent=1 // pred_check_branch
      %33 = sbr.rel (0) target = $region17
    $region16: #{_lambda_.1} parent=1 // pred_region
      %s35 = ssub.s32 8192, 8192
      %36 = vsyncadd [#allocation6], %s35
      %s37 = sshll.u32 [#allocation5], 4
      %s38 = int_to_ptr.vmem [resolvable:$true] %s37
      %43 = dma.hbm_to_vmem [thread:$0]  %s3, 8192, %s38, [#allocation6], 128, 128, 8
    $region17: #{_lambda_.1} parent=1 // pred_fallthru
      _
    // Predicated region
    $region18: #{_lambda_.1} parent=1 // pred_check
      _
    $region19: #{_lambda_.1} parent=1 // pred_check_branch
      %45 = sbr.rel (0) target = $region21
    $region20: #{_lambda_.1} parent=1 // pred_region
      %s47 = ssub.s32 8192, 8192
      %48 = vsyncadd [#allocation6], %s47
      %s49 = sshll.u32 [#allocation7], 4
      %s50 = int_to_ptr.vmem [resolvable:$true] %s49
      %55 = dma.hbm_to_vmem [thread:$0]  %s4, 8192, %s50, [#allocation6], 128, 128, 8
    $region21: #{_lambda_.1} parent=1 // pred_fallthru
      _
    // Predicated region
    $region22: #{_lambda_.1} parent=1 // pred_check
      _
    $region23: #{_lambda_.1} parent=1 // pred_check_branch
      %57 = sbr.rel (0) target = $region25
    $region24: #{_lambda_.1} parent=1 // pred_region
      %s59 = ssub.s32 8192, 8192
      %60 = vsyncadd [#allocation9], %s59
      %s61 = sshll.u32 [#allocation8], 4
      %s62 = int_to_ptr.vmem [resolvable:$true] %s61
      %67 = dma.hbm_to_vmem [thread:$0]  %s5, 8192, %s62, [#allocation9], 128, 128, 8
    $region25: #{_lambda_.1} parent=1 // pred_fallthru
      _
    // Predicated region
    $region26: #{_lambda_.1} parent=1 // pred_check
      _
    $region27: #{_lambda_.1} parent=1 // pred_check_branch
      %69 = sbr.rel (0) target = $region29
    $region28: #{_lambda_.1} parent=1 // pred_region
      %s71 = ssub.s32 8192, 8192
      %72 = vsyncadd [#allocation9], %s71
      %s73 = sshll.u32 [#allocation10], 4
      %s74 = int_to_ptr.vmem [resolvable:$true] %s73
      %79 = dma.hbm_to_vmem [thread:$0]  %s6, 8192, %s74, [#allocation9], 128, 128, 8
    $region29: #{_lambda_.1} parent=1 // pred_fallthru
      _
    // Predicated region
    $region30: #{_lambda_.1} parent=1 // pred_check
      _
    $region31: #{_lambda_.1} parent=1 // pred_check_branch
      %81 = sbr.rel (0) target = $region33
    $region32: #{_lambda_.1} parent=1 // pred_region
      %82 = dma.done [#allocation3], 8192
    $region33: #{_lambda_.1} parent=1 // pred_fallthru
      _
    // Predicated region
    $region34: #{_lambda_.1} parent=1 // pred_check
      _
    $region35: #{_lambda_.1} parent=1 // pred_check_branch
      %84 = sbr.rel (0) target = $region37
    $region36: #{_lambda_.1} parent=1 // pred_region
      %85 = dma.done [#allocation6], 8192
    $region37: #{_lambda_.1} parent=1 // pred_fallthru
      _
    // Predicated region
    $region38: #{_lambda_.1} parent=1 // pred_check
      _
    $region39: #{_lambda_.1} parent=1 // pred_check_branch
      %87 = sbr.rel (0) target = $region41
    $region40: #{_lambda_.1} parent=1 // pred_region
      %88 = dma.done [#allocation6], 8192
    $region41: #{_lambda_.1} parent=1 // pred_fallthru
      _
    // Predicated region
    $region42: #{_lambda_.1} parent=1 // pred_check
      _
    $region43: #{_lambda_.1} parent=1 // pred_check_branch
      %90 = sbr.rel (0) target = $region45
    $region44: #{_lambda_.1} parent=1 // pred_region
      %91 = dma.done [#allocation9], 8192
    $region45: #{_lambda_.1} parent=1 // pred_fallthru
      _
    // Predicated region
    $region46: #{_lambda_.1} parent=1 // pred_check
      _
    $region47: #{_lambda_.1} parent=1 // pred_check_branch
      %93 = sbr.rel (0) target = $region49
    $region48: #{_lambda_.1} parent=1 // pred_region
      %94 = dma.done [#allocation9], 8192
    $region49: #{_lambda_.1} parent=1 // pred_fallthru
      _
    %v95 = vld [vmem:[#allocation2] sm:$0xff]
    %v96 = vld [vmem:[#allocation2 + $0x8] sm:$0xff]
    %v97 = vld [vmem:[#allocation2 + $0x10] sm:$0xff]
    %v98 = vld [vmem:[#allocation2 + $0x18] sm:$0xff]
    %v99 = vld [vmem:[#allocation2 + $0x20] sm:$0xff]
    %v100 = vld [vmem:[#allocation2 + $0x28] sm:$0xff]
    %v101 = vld [vmem:[#allocation2 + $0x30] sm:$0xff]
    %v102 = vld [vmem:[#allocation2 + $0x38] sm:$0xff]
    %v103 = vld [vmem:[#allocation2 + $0x40] sm:$0xff]
    %v104 = vld [vmem:[#allocation2 + $0x48] sm:$0xff]
    %v105 = vld [vmem:[#allocation2 + $0x50] sm:$0xff]
    %v106 = vld [vmem:[#allocation2 + $0x58] sm:$0xff]
    %v107 = vld [vmem:[#allocation2 + $0x60] sm:$0xff]
    %v108 = vld [vmem:[#allocation2 + $0x68] sm:$0xff]
    %v109 = vld [vmem:[#allocation2 + $0x70] sm:$0xff]
    %v110 = vld [vmem:[#allocation2 + $0x78] sm:$0xff]
    %v111 = vld [vmem:[#allocation2 + $0x80] sm:$0xff]
    %v112 = vld [vmem:[#allocation2 + $0x88] sm:$0xff]
    %v113 = vld [vmem:[#allocation2 + $0x90] sm:$0xff]
    %v114 = vld [vmem:[#allocation2 + $0x98] sm:$0xff]
    %v115 = vld [vmem:[#allocation2 + $0xa0] sm:$0xff]
    %v116 = vld [vmem:[#allocation2 + $0xa8] sm:$0xff]
    %v117 = vld [vmem:[#allocation2 + $0xb0] sm:$0xff]
    %v118 = vld [vmem:[#allocation2 + $0xb8] sm:$0xff]
    %v119 = vld [vmem:[#allocation2 + $0xc0] sm:$0xff]
    %v120 = vld [vmem:[#allocation2 + $0xc8] sm:$0xff]
    %v121 = vld [vmem:[#allocation2 + $0xd0] sm:$0xff]
    %v122 = vld [vmem:[#allocation2 + $0xd8] sm:$0xff]
    %v123 = vld [vmem:[#allocation2 + $0xe0] sm:$0xff]
    %v124 = vld [vmem:[#allocation2 + $0xe8] sm:$0xff]
    %v125 = vld [vmem:[#allocation2 + $0xf0] sm:$0xff]
    %v126 = vld [vmem:[#allocation2 + $0xf8] sm:$0xff]
    %v127 = vld [vmem:[#allocation2 + $0x100] sm:$0xff]
    %v128 = vld [vmem:[#allocation2 + $0x108] sm:$0xff]
    %v129 = vld [vmem:[#allocation2 + $0x110] sm:$0xff]
    %v130 = vld [vmem:[#allocation2 + $0x118] sm:$0xff]
    %v131 = vld [vmem:[#allocation2 + $0x120] sm:$0xff]
    %v132 = vld [vmem:[#allocation2 + $0x128] sm:$0xff]
    %v133 = vld [vmem:[#allocation2 + $0x130] sm:$0xff]
    %v134 = vld [vmem:[#allocation2 + $0x138] sm:$0xff]
    %v135 = vld [vmem:[#allocation2 + $0x140] sm:$0xff]
    %v136 = vld [vmem:[#allocation2 + $0x148] sm:$0xff]
    %v137 = vld [vmem:[#allocation2 + $0x150] sm:$0xff]
    %v138 = vld [vmem:[#allocation2 + $0x158] sm:$0xff]
    %v139 = vld [vmem:[#allocation2 + $0x160] sm:$0xff]
    %v140 = vld [vmem:[#allocation2 + $0x168] sm:$0xff]
    %v141 = vld [vmem:[#allocation2 + $0x170] sm:$0xff]
    %v142 = vld [vmem:[#allocation2 + $0x178] sm:$0xff]
    %v143 = vld [vmem:[#allocation2 + $0x180] sm:$0xff]
    %v144 = vld [vmem:[#allocation2 + $0x188] sm:$0xff]
    %v145 = vld [vmem:[#allocation2 + $0x190] sm:$0xff]
    %v146 = vld [vmem:[#allocation2 + $0x198] sm:$0xff]
    %v147 = vld [vmem:[#allocation2 + $0x1a0] sm:$0xff]
    %v148 = vld [vmem:[#allocation2 + $0x1a8] sm:$0xff]
    %v149 = vld [vmem:[#allocation2 + $0x1b0] sm:$0xff]
    %v150 = vld [vmem:[#allocation2 + $0x1b8] sm:$0xff]
    %v151 = vld [vmem:[#allocation2 + $0x1c0] sm:$0xff]
    %v152 = vld [vmem:[#allocation2 + $0x1c8] sm:$0xff]
    %v153 = vld [vmem:[#allocation2 + $0x1d0] sm:$0xff]
    %v154 = vld [vmem:[#allocation2 + $0x1d8] sm:$0xff]
    %v155 = vld [vmem:[#allocation2 + $0x1e0] sm:$0xff]
    %v156 = vld [vmem:[#allocation2 + $0x1e8] sm:$0xff]
    %v157 = vld [vmem:[#allocation2 + $0x1f0] sm:$0xff]
    %v158 = vld [vmem:[#allocation2 + $0x1f8] sm:$0xff]
    %v159 = vld [vmem:[%s1] sm:$0xff]
    %v160 = vld [vmem:[%s1 + $0x8] sm:$0x1]
    %v161 = vld [vmem:[%s2] sm:$0x1]
    %v162 = vrot.slane %v95, 7
    %v163 = vrot.slane %v96, 7
    %v164 = vrot.slane %v97, 7
    %v165 = vrot.slane %v98, 7
    %v166 = vrot.slane %v99, 7
    %v167 = vrot.slane %v100, 7
    %v168 = vrot.slane %v101, 7
    %v169 = vrot.slane %v102, 7
    %v170 = vrot.slane %v103, 7
    %v171 = vrot.slane %v104, 7
    %v172 = vrot.slane %v105, 7
    %v173 = vrot.slane %v106, 7
    %v174 = vrot.slane %v107, 7
    %v175 = vrot.slane %v108, 7
    %v176 = vrot.slane %v109, 7
    %v177 = vrot.slane %v110, 7
    %v178 = vrot.slane %v111, 7
    %v179 = vrot.slane %v112, 7
    %v180 = vrot.slane %v113, 7
    %v181 = vrot.slane %v114, 7
    %v182 = vrot.slane %v115, 7
    %v183 = vrot.slane %v116, 7
    %v184 = vrot.slane %v117, 7
    %v185 = vrot.slane %v118, 7
    %v186 = vrot.slane %v119, 7
    %v187 = vrot.slane %v120, 7
    %v188 = vrot.slane %v121, 7
    %v189 = vrot.slane %v122, 7
    %v190 = vrot.slane %v123, 7
    %v191 = vrot.slane %v124, 7
    %v192 = vrot.slane %v125, 7
    %v193 = vrot.slane %v126, 7
    %v194 = vrot.slane %v127, 7
    %v195 = vrot.slane %v128, 7
    %v196 = vrot.slane %v129, 7
    %v197 = vrot.slane %v130, 7
    %v198 = vrot.slane %v131, 7
    %v199 = vrot.slane %v132, 7
    %v200 = vrot.slane %v133, 7
    %v201 = vrot.slane %v134, 7
    %v202 = vrot.slane %v135, 7
    %v203 = vrot.slane %v136, 7
    %v204 = vrot.slane %v137, 7
    %v205 = vrot.slane %v138, 7
    %v206 = vrot.slane %v139, 7
    %v207 = vrot.slane %v140, 7
    %v208 = vrot.slane %v141, 7
    %v209 = vrot.slane %v142, 7
    %v210 = vrot.slane %v143, 7
    %v211 = vrot.slane %v144, 7
    %v212 = vrot.slane %v145, 7
    %v213 = vrot.slane %v146, 7
    %v214 = vrot.slane %v147, 7
    %v215 = vrot.slane %v148, 7
    %v216 = vrot.slane %v149, 7
    %v217 = vrot.slane %v150, 7
    %v218 = vrot.slane %v151, 7
    %v219 = vrot.slane %v152, 7
    %v220 = vrot.slane %v153, 7
    %v221 = vrot.slane %v154, 7
    %v222 = vrot.slane %v155, 7
    %v223 = vrot.slane %v156, 7
    %v224 = vrot.slane %v157, 7
    %v225 = vrot.slane %v158, 7
    %v226 = vlaneseq
    %v227 = vshrl.u32 %v226, 7
    %vm228 = vcmp.lt.s32.totalorder %v227, 1
    %v229 = vsel %vm228, %v224, %v225
    %v230 = vsel %vm228, %v223, %v224
    %v231 = vsel %vm228, %v222, %v223
    %v232 = vsel %vm228, %v221, %v222
    %v233 = vsel %vm228, %v220, %v221
    %v234 = vsel %vm228, %v219, %v220
    %v235 = vsel %vm228, %v218, %v219
    %v236 = vsel %vm228, %v217, %v218
    %v237 = vsel %vm228, %v216, %v217
    %v238 = vsel %vm228, %v215, %v216
    %v239 = vsel %vm228, %v214, %v215
    %v240 = vsel %vm228, %v213, %v214
    %v241 = vsel %vm228, %v212, %v213
    %v242 = vsel %vm228, %v211, %v212
    %v243 = vsel %vm228, %v210, %v211
    %v244 = vsel %vm228, %v209, %v210
    %v245 = vsel %vm228, %v208, %v209
    %v246 = vsel %vm228, %v207, %v208
    %v247 = vsel %vm228, %v206, %v207
    %v248 = vsel %vm228, %v205, %v206
    %v249 = vsel %vm228, %v204, %v205
    %v250 = vsel %vm228, %v203, %v204
    %v251 = vsel %vm228, %v202, %v203
    %v252 = vsel %vm228, %v201, %v202
    %v253 = vsel %vm228, %v200, %v201
    %v254 = vsel %vm228, %v199, %v200
    %v255 = vsel %vm228, %v198, %v199
    %v256 = vsel %vm228, %v197, %v198
    %v257 = vsel %vm228, %v196, %v197
    %v258 = vsel %vm228, %v195, %v196
    %v259 = vsel %vm228, %v194, %v195
    %v260 = vsel %vm228, %v193, %v194
    %v261 = vsel %vm228, %v192, %v193
    %v262 = vsel %vm228, %v191, %v192
    %v263 = vsel %vm228, %v190, %v191
    %v264 = vsel %vm228, %v189, %v190
    %v265 = vsel %vm228, %v188, %v189
    %v266 = vsel %vm228, %v187, %v188
    %v267 = vsel %vm228, %v186, %v187
    %v268 = vsel %vm228, %v185, %v186
    %v269 = vsel %vm228, %v184, %v185
    %v270 = vsel %vm228, %v183, %v184
    %v271 = vsel %vm228, %v182, %v183
    %v272 = vsel %vm228, %v181, %v182
    %v273 = vsel %vm228, %v180, %v181
    %v274 = vsel %vm228, %v179, %v180
    %v275 = vsel %vm228, %v178, %v179
    %v276 = vsel %vm228, %v177, %v178
    %v277 = vsel %vm228, %v176, %v177
    %v278 = vsel %vm228, %v175, %v176
    %v279 = vsel %vm228, %v174, %v175
    %v280 = vsel %vm228, %v173, %v174
    %v281 = vsel %vm228, %v172, %v173
    %v282 = vsel %vm228, %v171, %v172
    %v283 = vsel %vm228, %v170, %v171
    %v284 = vsel %vm228, %v169, %v170
    %v285 = vsel %vm228, %v168, %v169
    %v286 = vsel %vm228, %v167, %v168
    %v287 = vsel %vm228, %v166, %v167
    %v288 = vsel %vm228, %v165, %v166
    %v289 = vsel %vm228, %v164, %v165
    %v290 = vsel %vm228, %v163, %v164
    %v291 = vsel %vm228, %v162, %v163
    %v292 = vsel %vm228, %v225, %v162
    %v293 = vld [vmem:[#allocation5] sm:$0xff]
    %v294 = vld [vmem:[#allocation5 + $0x8] sm:$0xff]
    %v295 = vld [vmem:[#allocation5 + $0x10] sm:$0xff]
    %v296 = vld [vmem:[#allocation5 + $0x18] sm:$0xff]
    %v297 = vld [vmem:[#allocation5 + $0x20] sm:$0xff]
    %v298 = vld [vmem:[#allocation5 + $0x28] sm:$0xff]
    %v299 = vld [vmem:[#allocation5 + $0x30] sm:$0xff]
    %v300 = vld [vmem:[#allocation5 + $0x38] sm:$0xff]
    %v301 = vld [vmem:[#allocation5 + $0x40] sm:$0xff]
    %v302 = vld [vmem:[#allocation5 + $0x48] sm:$0xff]
    %v303 = vld [vmem:[#allocation5 + $0x50] sm:$0xff]
    %v304 = vld [vmem:[#allocation5 + $0x58] sm:$0xff]
    %v305 = vld [vmem:[#allocation5 + $0x60] sm:$0xff]
    %v306 = vld [vmem:[#allocation5 + $0x68] sm:$0xff]
    %v307 = vld [vmem:[#allocation5 + $0x70] sm:$0xff]
    %v308 = vld [vmem:[#allocation5 + $0x78] sm:$0xff]
    %v309 = vld [vmem:[#allocation5 + $0x80] sm:$0xff]
    %v310 = vld [vmem:[#allocation5 + $0x88] sm:$0xff]
    %v311 = vld [vmem:[#allocation5 + $0x90] sm:$0xff]
    %v312 = vld [vmem:[#allocation5 + $0x98] sm:$0xff]
    %v313 = vld [vmem:[#allocation5 + $0xa0] sm:$0xff]
    %v314 = vld [vmem:[#allocation5 + $0xa8] sm:$0xff]
    %v315 = vld [vmem:[#allocation5 + $0xb0] sm:$0xff]
    %v316 = vld [vmem:[#allocation5 + $0xb8] sm:$0xff]
    %v317 = vld [vmem:[#allocation5 + $0xc0] sm:$0xff]
    %v318 = vld [vmem:[#allocation5 + $0xc8] sm:$0xff]
    %v319 = vld [vmem:[#allocation5 + $0xd0] sm:$0xff]
    %v320 = vld [vmem:[#allocation5 + $0xd8] sm:$0xff]
    %v321 = vld [vmem:[#allocation5 + $0xe0] sm:$0xff]
    %v322 = vld [vmem:[#allocation5 + $0xe8] sm:$0xff]
    %v323 = vld [vmem:[#allocation5 + $0xf0] sm:$0xff]
    %v324 = vld [vmem:[#allocation5 + $0xf8] sm:$0xff]
    %v325 = vld [vmem:[#allocation5 + $0x100] sm:$0xff]
    %v326 = vld [vmem:[#allocation5 + $0x108] sm:$0xff]
    %v327 = vld [vmem:[#allocation5 + $0x110] sm:$0xff]
    %v328 = vld [vmem:[#allocation5 + $0x118] sm:$0xff]
    %v329 = vld [vmem:[#allocation5 + $0x120] sm:$0xff]
    %v330 = vld [vmem:[#allocation5 + $0x128] sm:$0xff]
    %v331 = vld [vmem:[#allocation5 + $0x130] sm:$0xff]
    %v332 = vld [vmem:[#allocation5 + $0x138] sm:$0xff]
    %v333 = vld [vmem:[#allocation5 + $0x140] sm:$0xff]
    %v334 = vld [vmem:[#allocation5 + $0x148] sm:$0xff]
    %v335 = vld [vmem:[#allocation5 + $0x150] sm:$0xff]
    %v336 = vld [vmem:[#allocation5 + $0x158] sm:$0xff]
    %v337 = vld [vmem:[#allocation5 + $0x160] sm:$0xff]
    %v338 = vld [vmem:[#allocation5 + $0x168] sm:$0xff]
    %v339 = vld [vmem:[#allocation5 + $0x170] sm:$0xff]
    %v340 = vld [vmem:[#allocation5 + $0x178] sm:$0xff]
    %v341 = vld [vmem:[#allocation5 + $0x180] sm:$0xff]
    %v342 = vld [vmem:[#allocation5 + $0x188] sm:$0xff]
    %v343 = vld [vmem:[#allocation5 + $0x190] sm:$0xff]
    %v344 = vld [vmem:[#allocation5 + $0x198] sm:$0xff]
    %v345 = vld [vmem:[#allocation5 + $0x1a0] sm:$0xff]
    %v346 = vld [vmem:[#allocation5 + $0x1a8] sm:$0xff]
    %v347 = vld [vmem:[#allocation5 + $0x1b0] sm:$0xff]
    %v348 = vld [vmem:[#allocation5 + $0x1b8] sm:$0xff]
    %v349 = vld [vmem:[#allocation5 + $0x1c0] sm:$0xff]
    %v350 = vld [vmem:[#allocation5 + $0x1c8] sm:$0xff]
    %v351 = vld [vmem:[#allocation5 + $0x1d0] sm:$0xff]
    %v352 = vld [vmem:[#allocation5 + $0x1d8] sm:$0xff]
    %v353 = vld [vmem:[#allocation5 + $0x1e0] sm:$0xff]
    %v354 = vld [vmem:[#allocation5 + $0x1e8] sm:$0xff]
    %v355 = vld [vmem:[#allocation5 + $0x1f0] sm:$0xff]
    %v356 = vld [vmem:[#allocation5 + $0x1f8] sm:$0xff]
    %358 = vset.pattern.permute.xlu0 0
    %359 = vperm.xlu0 %358, %v293
    %v360 = vpop.permute.xlu0 %359
    %363 = vset.pattern.permute.xlu0 0
    %364 = vperm.xlu0 %363, %v294
    %v365 = vpop.permute.xlu0 %364
    %368 = vset.pattern.permute.xlu0 0
    %369 = vperm.xlu0 %368, %v295
    %v370 = vpop.permute.xlu0 %369
    %373 = vset.pattern.permute.xlu0 0
    %374 = vperm.xlu0 %373, %v296
    %v375 = vpop.permute.xlu0 %374
    %378 = vset.pattern.permute.xlu0 0
    %379 = vperm.xlu0 %378, %v297
    %v380 = vpop.permute.xlu0 %379
    %383 = vset.pattern.permute.xlu0 0
    %384 = vperm.xlu0 %383, %v298
    %v385 = vpop.permute.xlu0 %384
    %388 = vset.pattern.permute.xlu0 0
    %389 = vperm.xlu0 %388, %v299
    %v390 = vpop.permute.xlu0 %389
    %393 = vset.pattern.permute.xlu0 0
    %394 = vperm.xlu0 %393, %v300
    %v395 = vpop.permute.xlu0 %394
    %398 = vset.pattern.permute.xlu0 0
    %399 = vperm.xlu0 %398, %v301
    %v400 = vpop.permute.xlu0 %399
    %403 = vset.pattern.permute.xlu0 0
    %404 = vperm.xlu0 %403, %v302
    %v405 = vpop.permute.xlu0 %404
    %408 = vset.pattern.permute.xlu0 0
    %409 = vperm.xlu0 %408, %v303
    %v410 = vpop.permute.xlu0 %409
    %413 = vset.pattern.permute.xlu0 0
    %414 = vperm.xlu0 %413, %v304
    %v415 = vpop.permute.xlu0 %414
    %418 = vset.pattern.permute.xlu0 0
    %419 = vperm.xlu0 %418, %v305
    %v420 = vpop.permute.xlu0 %419
    %423 = vset.pattern.permute.xlu0 0
    %424 = vperm.xlu0 %423, %v306
    %v425 = vpop.permute.xlu0 %424
    %428 = vset.pattern.permute.xlu0 0
    %429 = vperm.xlu0 %428, %v307
    %v430 = vpop.permute.xlu0 %429
    %433 = vset.pattern.permute.xlu0 0
    %434 = vperm.xlu0 %433, %v308
    %v435 = vpop.permute.xlu0 %434
    %438 = vset.pattern.permute.xlu0 0
    %439 = vperm.xlu0 %438, %v309
    %v440 = vpop.permute.xlu0 %439
    %443 = vset.pattern.permute.xlu0 0
    %444 = vperm.xlu0 %443, %v310
    %v445 = vpop.permute.xlu0 %444
    %448 = vset.pattern.permute.xlu0 0
    %449 = vperm.xlu0 %448, %v311
    %v450 = vpop.permute.xlu0 %449
    %453 = vset.pattern.permute.xlu0 0
    %454 = vperm.xlu0 %453, %v312
    %v455 = vpop.permute.xlu0 %454
    %458 = vset.pattern.permute.xlu0 0
    %459 = vperm.xlu0 %458, %v313
    %v460 = vpop.permute.xlu0 %459
    %463 = vset.pattern.permute.xlu0 0
    %464 = vperm.xlu0 %463, %v314
    %v465 = vpop.permute.xlu0 %464
    %468 = vset.pattern.permute.xlu0 0
    %469 = vperm.xlu0 %468, %v315
    %v470 = vpop.permute.xlu0 %469
    %473 = vset.pattern.permute.xlu0 0
    %474 = vperm.xlu0 %473, %v316
    %v475 = vpop.permute.xlu0 %474
    %478 = vset.pattern.permute.xlu0 0
    %479 = vperm.xlu0 %478, %v317
    %v480 = vpop.permute.xlu0 %479
    %483 = vset.pattern.permute.xlu0 0
    %484 = vperm.xlu0 %483, %v318
    %v485 = vpop.permute.xlu0 %484
    %488 = vset.pattern.permute.xlu0 0
    %489 = vperm.xlu0 %488, %v319
    %v490 = vpop.permute.xlu0 %489
    %493 = vset.pattern.permute.xlu0 0
    %494 = vperm.xlu0 %493, %v320
    %v495 = vpop.permute.xlu0 %494
    %498 = vset.pattern.permute.xlu0 0
    %499 = vperm.xlu0 %498, %v321
    %v500 = vpop.permute.xlu0 %499
    %503 = vset.pattern.permute.xlu0 0
    %504 = vperm.xlu0 %503, %v322
    %v505 = vpop.permute.xlu0 %504
    %508 = vset.pattern.permute.xlu0 0
    %509 = vperm.xlu0 %508, %v323
    %v510 = vpop.permute.xlu0 %509
    %513 = vset.pattern.permute.xlu0 0
    %514 = vperm.xlu0 %513, %v324
    %v515 = vpop.permute.xlu0 %514
    %518 = vset.pattern.permute.xlu0 0
    %519 = vperm.xlu0 %518, %v325
    %v520 = vpop.permute.xlu0 %519
    %523 = vset.pattern.permute.xlu0 0
    %524 = vperm.xlu0 %523, %v326
    %v525 = vpop.permute.xlu0 %524
    %528 = vset.pattern.permute.xlu0 0
    %529 = vperm.xlu0 %528, %v327
    %v530 = vpop.permute.xlu0 %529
    %533 = vset.pattern.permute.xlu0 0
    %534 = vperm.xlu0 %533, %v328
    %v535 = vpop.permute.xlu0 %534
    %538 = vset.pattern.permute.xlu0 0
    %539 = vperm.xlu0 %538, %v329
    %v540 = vpop.permute.xlu0 %539
    %543 = vset.pattern.permute.xlu0 0
    %544 = vperm.xlu0 %543, %v330
    %v545 = vpop.permute.xlu0 %544
    %548 = vset.pattern.permute.xlu0 0
    %549 = vperm.xlu0 %548, %v331
    %v550 = vpop.permute.xlu0 %549
    %553 = vset.pattern.permute.xlu0 0
    %554 = vperm.xlu0 %553, %v332
    %v555 = vpop.permute.xlu0 %554
    %558 = vset.pattern.permute.xlu0 0
    %559 = vperm.xlu0 %558, %v333
    %v560 = vpop.permute.xlu0 %559
    %563 = vset.pattern.permute.xlu0 0
    %564 = vperm.xlu0 %563, %v334
    %v565 = vpop.permute.xlu0 %564
    %568 = vset.pattern.permute.xlu0 0
    %569 = vperm.xlu0 %568, %v335
    %v570 = vpop.permute.xlu0 %569
    %573 = vset.pattern.permute.xlu0 0
    %574 = vperm.xlu0 %573, %v336
    %v575 = vpop.permute.xlu0 %574
    %578 = vset.pattern.permute.xlu0 0
    %579 = vperm.xlu0 %578, %v337
    %v580 = vpop.permute.xlu0 %579
    %583 = vset.pattern.permute.xlu0 0
    %584 = vperm.xlu0 %583, %v338
    %v585 = vpop.permute.xlu0 %584
    %588 = vset.pattern.permute.xlu0 0
    %589 = vperm.xlu0 %588, %v339
    %v590 = vpop.permute.xlu0 %589
    %593 = vset.pattern.permute.xlu0 0
    %594 = vperm.xlu0 %593, %v340
    %v595 = vpop.permute.xlu0 %594
    %598 = vset.pattern.permute.xlu0 0
    %599 = vperm.xlu0 %598, %v341
    %v600 = vpop.permute.xlu0 %599
    %603 = vset.pattern.permute.xlu0 0
    %604 = vperm.xlu0 %603, %v342
    %v605 = vpop.permute.xlu0 %604
    %608 = vset.pattern.permute.xlu0 0
    %609 = vperm.xlu0 %608, %v343
    %v610 = vpop.permute.xlu0 %609
    %613 = vset.pattern.permute.xlu0 0
    %614 = vperm.xlu0 %613, %v344
    %v615 = vpop.permute.xlu0 %614
    %618 = vset.pattern.permute.xlu0 0
    %619 = vperm.xlu0 %618, %v345
    %v620 = vpop.permute.xlu0 %619
    %623 = vset.pattern.permute.xlu0 0
    %624 = vperm.xlu0 %623, %v346
    %v625 = vpop.permute.xlu0 %624
    %628 = vset.pattern.permute.xlu0 0
    %629 = vperm.xlu0 %628, %v347
    %v630 = vpop.permute.xlu0 %629
    %633 = vset.pattern.permute.xlu0 0
    %634 = vperm.xlu0 %633, %v348
    %v635 = vpop.permute.xlu0 %634
    %638 = vset.pattern.permute.xlu0 0
    %639 = vperm.xlu0 %638, %v349
    %v640 = vpop.permute.xlu0 %639
    %643 = vset.pattern.permute.xlu0 0
    %644 = vperm.xlu0 %643, %v350
    %v645 = vpop.permute.xlu0 %644
    %648 = vset.pattern.permute.xlu0 0
    %649 = vperm.xlu0 %648, %v351
    %v650 = vpop.permute.xlu0 %649
    %653 = vset.pattern.permute.xlu0 0
    %654 = vperm.xlu0 %653, %v352
    %v655 = vpop.permute.xlu0 %654
    %658 = vset.pattern.permute.xlu0 0
    %659 = vperm.xlu0 %658, %v353
    %v660 = vpop.permute.xlu0 %659
    %663 = vset.pattern.permute.xlu0 0
    %664 = vperm.xlu0 %663, %v354
    %v665 = vpop.permute.xlu0 %664
    %668 = vset.pattern.permute.xlu0 0
    %669 = vperm.xlu0 %668, %v355
    %v670 = vpop.permute.xlu0 %669
    %673 = vset.pattern.permute.xlu0 0
    %674 = vperm.xlu0 %673, %v356
    %v675 = vpop.permute.xlu0 %674
    %v677 = vmul.f32 %v292, %v360
    %v678 = vmul.f32 %v291, %v365
    %v679 = vmul.f32 %v290, %v370
    %v680 = vmul.f32 %v289, %v375
    %v681 = vmul.f32 %v288, %v380
    %v682 = vmul.f32 %v287, %v385
    %v683 = vmul.f32 %v286, %v390
    %v684 = vmul.f32 %v285, %v395
    %v685 = vmul.f32 %v284, %v400
    %v686 = vmul.f32 %v283, %v405
    %v687 = vmul.f32 %v282, %v410
    %v688 = vmul.f32 %v281, %v415
    %v689 = vmul.f32 %v280, %v420
    %v690 = vmul.f32 %v279, %v425
    %v691 = vmul.f32 %v278, %v430
    %v692 = vmul.f32 %v277, %v435
    %v693 = vmul.f32 %v276, %v440
    %v694 = vmul.f32 %v275, %v445
    %v695 = vmul.f32 %v274, %v450
    %v696 = vmul.f32 %v273, %v455
    %v697 = vmul.f32 %v272, %v460
    %v698 = vmul.f32 %v271, %v465
    %v699 = vmul.f32 %v270, %v470
    %v700 = vmul.f32 %v269, %v475
    %v701 = vmul.f32 %v268, %v480
    %v702 = vmul.f32 %v267, %v485
    %v703 = vmul.f32 %v266, %v490
    %v704 = vmul.f32 %v265, %v495
    %v705 = vmul.f32 %v264, %v500
    %v706 = vmul.f32 %v263, %v505
    %v707 = vmul.f32 %v262, %v510
    %v708 = vmul.f32 %v261, %v515
    %v709 = vmul.f32 %v260, %v520
    %v710 = vmul.f32 %v259, %v525
    %v711 = vmul.f32 %v258, %v530
    %v712 = vmul.f32 %v257, %v535
    %v713 = vmul.f32 %v256, %v540
    %v714 = vmul.f32 %v255, %v545
    %v715 = vmul.f32 %v254, %v550
    %v716 = vmul.f32 %v253, %v555
    %v717 = vmul.f32 %v252, %v560
    %v718 = vmul.f32 %v251, %v565
    %v719 = vmul.f32 %v250, %v570
    %v720 = vmul.f32 %v249, %v575
    %v721 = vmul.f32 %v248, %v580
    %v722 = vmul.f32 %v247, %v585
    %v723 = vmul.f32 %v246, %v590
    %v724 = vmul.f32 %v245, %v595
    %v725 = vmul.f32 %v244, %v600
    %v726 = vmul.f32 %v243, %v605
    %v727 = vmul.f32 %v242, %v610
    %v728 = vmul.f32 %v241, %v615
    %v729 = vmul.f32 %v240, %v620
    %v730 = vmul.f32 %v239, %v625
    %v731 = vmul.f32 %v238, %v630
    %v732 = vmul.f32 %v237, %v635
    %v733 = vmul.f32 %v236, %v640
    %v734 = vmul.f32 %v235, %v645
    %v735 = vmul.f32 %v234, %v650
    %v736 = vmul.f32 %v233, %v655
    %v737 = vmul.f32 %v232, %v660
    %v738 = vmul.f32 %v231, %v665
    %v739 = vmul.f32 %v230, %v670
    %v740 = vmul.f32 %v229, %v675
    %v741 = vrot.slane %v95, 1
    %v742 = vrot.slane %v96, 1
    %v743 = vrot.slane %v97, 1
    %v744 = vrot.slane %v98, 1
    %v745 = vrot.slane %v99, 1
    %v746 = vrot.slane %v100, 1
    %v747 = vrot.slane %v101, 1
    %v748 = vrot.slane %v102, 1
    %v749 = vrot.slane %v103, 1
    %v750 = vrot.slane %v104, 1
    %v751 = vrot.slane %v105, 1
    %v752 = vrot.slane %v106, 1
    %v753 = vrot.slane %v107, 1
    %v754 = vrot.slane %v108, 1
    %v755 = vrot.slane %v109, 1
    %v756 = vrot.slane %v110, 1
    %v757 = vrot.slane %v111, 1
    %v758 = vrot.slane %v112, 1
    %v759 = vrot.slane %v113, 1
    %v760 = vrot.slane %v114, 1
    %v761 = vrot.slane %v115, 1
    %v762 = vrot.slane %v116, 1
    %v763 = vrot.slane %v117, 1
    %v764 = vrot.slane %v118, 1
    %v765 = vrot.slane %v119, 1
    %v766 = vrot.slane %v120, 1
    %v767 = vrot.slane %v121, 1
    %v768 = vrot.slane %v122, 1
    %v769 = vrot.slane %v123, 1
    %v770 = vrot.slane %v124, 1
    %v771 = vrot.slane %v125, 1
    %v772 = vrot.slane %v126, 1
    %v773 = vrot.slane %v127, 1
    %v774 = vrot.slane %v128, 1
    %v775 = vrot.slane %v129, 1
    %v776 = vrot.slane %v130, 1
    %v777 = vrot.slane %v131, 1
    %v778 = vrot.slane %v132, 1
    %v779 = vrot.slane %v133, 1
    %v780 = vrot.slane %v134, 1
    %v781 = vrot.slane %v135, 1
    %v782 = vrot.slane %v136, 1
    %v783 = vrot.slane %v137, 1
    %v784 = vrot.slane %v138, 1
    %v785 = vrot.slane %v139, 1
    %v786 = vrot.slane %v140, 1
    %v787 = vrot.slane %v141, 1
    %v788 = vrot.slane %v142, 1
    %v789 = vrot.slane %v143, 1
    %v790 = vrot.slane %v144, 1
    %v791 = vrot.slane %v145, 1
    %v792 = vrot.slane %v146, 1
    %v793 = vrot.slane %v147, 1
    %v794 = vrot.slane %v148, 1
    %v795 = vrot.slane %v149, 1
    %v796 = vrot.slane %v150, 1
    %v797 = vrot.slane %v151, 1
    %v798 = vrot.slane %v152, 1
    %v799 = vrot.slane %v153, 1
    %v800 = vrot.slane %v154, 1
    %v801 = vrot.slane %v155, 1
    %v802 = vrot.slane %v156, 1
    %v803 = vrot.slane %v157, 1
    %v804 = vrot.slane %v158, 1
    %vm805 = vcmp.lt.s32.totalorder %v227, 7
    %v806 = vsel %vm805, %v803, %v804
    %v807 = vsel %vm805, %v802, %v803
    %v808 = vsel %vm805, %v801, %v802
    %v809 = vsel %vm805, %v800, %v801
    %v810 = vsel %vm805, %v799, %v800
    %v811 = vsel %vm805, %v798, %v799
    %v812 = vsel %vm805, %v797, %v798
    %v813 = vsel %vm805, %v796, %v797
    %v814 = vsel %vm805, %v795, %v796
    %v815 = vsel %vm805, %v794, %v795
    %v816 = vsel %vm805, %v793, %v794
    %v817 = vsel %vm805, %v792, %v793
    %v818 = vsel %vm805, %v791, %v792
    %v819 = vsel %vm805, %v790, %v791
    %v820 = vsel %vm805, %v789, %v790
    %v821 = vsel %vm805, %v788, %v789
    %v822 = vsel %vm805, %v787, %v788
    %v823 = vsel %vm805, %v786, %v787
    %v824 = vsel %vm805, %v785, %v786
    %v825 = vsel %vm805, %v784, %v785
    %v826 = vsel %vm805, %v783, %v784
    %v827 = vsel %vm805, %v782, %v783
    %v828 = vsel %vm805, %v781, %v782
    %v829 = vsel %vm805, %v780, %v781
    %v830 = vsel %vm805, %v779, %v780
    %v831 = vsel %vm805, %v778, %v779
    %v832 = vsel %vm805, %v777, %v778
    %v833 = vsel %vm805, %v776, %v777
    %v834 = vsel %vm805, %v775, %v776
    %v835 = vsel %vm805, %v774, %v775
    %v836 = vsel %vm805, %v773, %v774
    %v837 = vsel %vm805, %v772, %v773
    %v838 = vsel %vm805, %v771, %v772
    %v839 = vsel %vm805, %v770, %v771
    %v840 = vsel %vm805, %v769, %v770
    %v841 = vsel %vm805, %v768, %v769
    %v842 = vsel %vm805, %v767, %v768
    %v843 = vsel %vm805, %v766, %v767
    %v844 = vsel %vm805, %v765, %v766
    %v845 = vsel %vm805, %v764, %v765
    %v846 = vsel %vm805, %v763, %v764
    %v847 = vsel %vm805, %v762, %v763
    %v848 = vsel %vm805, %v761, %v762
    %v849 = vsel %vm805, %v760, %v761
    %v850 = vsel %vm805, %v759, %v760
    %v851 = vsel %vm805, %v758, %v759
    %v852 = vsel %vm805, %v757, %v758
    %v853 = vsel %vm805, %v756, %v757
    %v854 = vsel %vm805, %v755, %v756
    %v855 = vsel %vm805, %v754, %v755
    %v856 = vsel %vm805, %v753, %v754
    %v857 = vsel %vm805, %v752, %v753
    %v858 = vsel %vm805, %v751, %v752
    %v859 = vsel %vm805, %v750, %v751
    %v860 = vsel %vm805, %v749, %v750
    %v861 = vsel %vm805, %v748, %v749
    %v862 = vsel %vm805, %v747, %v748
    %v863 = vsel %vm805, %v746, %v747
    %v864 = vsel %vm805, %v745, %v746
    %v865 = vsel %vm805, %v744, %v745
    %v866 = vsel %vm805, %v743, %v744
    %v867 = vsel %vm805, %v742, %v743
    %v868 = vsel %vm805, %v741, %v742
    %v869 = vsel %vm805, %v804, %v741
    %v870 = vld [vmem:[#allocation7] sm:$0xff]
    %v871 = vld [vmem:[#allocation7 + $0x8] sm:$0xff]
    %v872 = vld [vmem:[#allocation7 + $0x10] sm:$0xff]
    %v873 = vld [vmem:[#allocation7 + $0x18] sm:$0xff]
    %v874 = vld [vmem:[#allocation7 + $0x20] sm:$0xff]
    %v875 = vld [vmem:[#allocation7 + $0x28] sm:$0xff]
    %v876 = vld [vmem:[#allocation7 + $0x30] sm:$0xff]
    %v877 = vld [vmem:[#allocation7 + $0x38] sm:$0xff]
    %v878 = vld [vmem:[#allocation7 + $0x40] sm:$0xff]
    %v879 = vld [vmem:[#allocation7 + $0x48] sm:$0xff]
    %v880 = vld [vmem:[#allocation7 + $0x50] sm:$0xff]
    %v881 = vld [vmem:[#allocation7 + $0x58] sm:$0xff]
    %v882 = vld [vmem:[#allocation7 + $0x60] sm:$0xff]
    %v883 = vld [vmem:[#allocation7 + $0x68] sm:$0xff]
    %v884 = vld [vmem:[#allocation7 + $0x70] sm:$0xff]
    %v885 = vld [vmem:[#allocation7 + $0x78] sm:$0xff]
    %v886 = vld [vmem:[#allocation7 + $0x80] sm:$0xff]
    %v887 = vld [vmem:[#allocation7 + $0x88] sm:$0xff]
    %v888 = vld [vmem:[#allocation7 + $0x90] sm:$0xff]
    %v889 = vld [vmem:[#allocation7 + $0x98] sm:$0xff]
    %v890 = vld [vmem:[#allocation7 + $0xa0] sm:$0xff]
    %v891 = vld [vmem:[#allocation7 + $0xa8] sm:$0xff]
    %v892 = vld [vmem:[#allocation7 + $0xb0] sm:$0xff]
    %v893 = vld [vmem:[#allocation7 + $0xb8] sm:$0xff]
    %v894 = vld [vmem:[#allocation7 + $0xc0] sm:$0xff]
    %v895 = vld [vmem:[#allocation7 + $0xc8] sm:$0xff]
    %v896 = vld [vmem:[#allocation7 + $0xd0] sm:$0xff]
    %v897 = vld [vmem:[#allocation7 + $0xd8] sm:$0xff]
    %v898 = vld [vmem:[#allocation7 + $0xe0] sm:$0xff]
    %v899 = vld [vmem:[#allocation7 + $0xe8] sm:$0xff]
    %v900 = vld [vmem:[#allocation7 + $0xf0] sm:$0xff]
    %v901 = vld [vmem:[#allocation7 + $0xf8] sm:$0xff]
    %v902 = vld [vmem:[#allocation7 + $0x100] sm:$0xff]
    %v903 = vld [vmem:[#allocation7 + $0x108] sm:$0xff]
    %v904 = vld [vmem:[#allocation7 + $0x110] sm:$0xff]
    %v905 = vld [vmem:[#allocation7 + $0x118] sm:$0xff]
    %v906 = vld [vmem:[#allocation7 + $0x120] sm:$0xff]
    %v907 = vld [vmem:[#allocation7 + $0x128] sm:$0xff]
    %v908 = vld [vmem:[#allocation7 + $0x130] sm:$0xff]
    %v909 = vld [vmem:[#allocation7 + $0x138] sm:$0xff]
    %v910 = vld [vmem:[#allocation7 + $0x140] sm:$0xff]
    %v911 = vld [vmem:[#allocation7 + $0x148] sm:$0xff]
    %v912 = vld [vmem:[#allocation7 + $0x150] sm:$0xff]
    %v913 = vld [vmem:[#allocation7 + $0x158] sm:$0xff]
    %v914 = vld [vmem:[#allocation7 + $0x160] sm:$0xff]
    %v915 = vld [vmem:[#allocation7 + $0x168] sm:$0xff]
    %v916 = vld [vmem:[#allocation7 + $0x170] sm:$0xff]
    %v917 = vld [vmem:[#allocation7 + $0x178] sm:$0xff]
    %v918 = vld [vmem:[#allocation7 + $0x180] sm:$0xff]
    %v919 = vld [vmem:[#allocation7 + $0x188] sm:$0xff]
    %v920 = vld [vmem:[#allocation7 + $0x190] sm:$0xff]
    %v921 = vld [vmem:[#allocation7 + $0x198] sm:$0xff]
    %v922 = vld [vmem:[#allocation7 + $0x1a0] sm:$0xff]
    %v923 = vld [vmem:[#allocation7 + $0x1a8] sm:$0xff]
    %v924 = vld [vmem:[#allocation7 + $0x1b0] sm:$0xff]
    %v925 = vld [vmem:[#allocation7 + $0x1b8] sm:$0xff]
    %v926 = vld [vmem:[#allocation7 + $0x1c0] sm:$0xff]
    %v927 = vld [vmem:[#allocation7 + $0x1c8] sm:$0xff]
    %v928 = vld [vmem:[#allocation7 + $0x1d0] sm:$0xff]
    %v929 = vld [vmem:[#allocation7 + $0x1d8] sm:$0xff]
    %v930 = vld [vmem:[#allocation7 + $0x1e0] sm:$0xff]
    %v931 = vld [vmem:[#allocation7 + $0x1e8] sm:$0xff]
    %v932 = vld [vmem:[#allocation7 + $0x1f0] sm:$0xff]
    %v933 = vld [vmem:[#allocation7 + $0x1f8] sm:$0xff]
    %935 = vset.pattern.permute.xlu0 0
    %936 = vperm.xlu0 %935, %v870
    %v937 = vpop.permute.xlu0 %936
    %940 = vset.pattern.permute.xlu0 0
    %941 = vperm.xlu0 %940, %v871
    %v942 = vpop.permute.xlu0 %941
    %945 = vset.pattern.permute.xlu0 0
    %946 = vperm.xlu0 %945, %v872
    %v947 = vpop.permute.xlu0 %946
    %950 = vset.pattern.permute.xlu0 0
    %951 = vperm.xlu0 %950, %v873
    %v952 = vpop.permute.xlu0 %951
    %955 = vset.pattern.permute.xlu0 0
    %956 = vperm.xlu0 %955, %v874
    %v957 = vpop.permute.xlu0 %956
    %960 = vset.pattern.permute.xlu0 0
    %961 = vperm.xlu0 %960, %v875
    %v962 = vpop.permute.xlu0 %961
    %965 = vset.pattern.permute.xlu0 0
    %966 = vperm.xlu0 %965, %v876
    %v967 = vpop.permute.xlu0 %966
    %970 = vset.pattern.permute.xlu0 0
    %971 = vperm.xlu0 %970, %v877
    %v972 = vpop.permute.xlu0 %971
    %975 = vset.pattern.permute.xlu0 0
    %976 = vperm.xlu0 %975, %v878
    %v977 = vpop.permute.xlu0 %976
    %980 = vset.pattern.permute.xlu0 0
    %981 = vperm.xlu0 %980, %v879
    %v982 = vpop.permute.xlu0 %981
    %985 = vset.pattern.permute.xlu0 0
    %986 = vperm.xlu0 %985, %v880
    %v987 = vpop.permute.xlu0 %986
    %990 = vset.pattern.permute.xlu0 0
    %991 = vperm.xlu0 %990, %v881
    %v992 = vpop.permute.xlu0 %991
    %995 = vset.pattern.permute.xlu0 0
    %996 = vperm.xlu0 %995, %v882
    %v997 = vpop.permute.xlu0 %996
    %1000 = vset.pattern.permute.xlu0 0
    %1001 = vperm.xlu0 %1000, %v883
    %v1002 = vpop.permute.xlu0 %1001
    %1005 = vset.pattern.permute.xlu0 0
    %1006 = vperm.xlu0 %1005, %v884
    %v1007 = vpop.permute.xlu0 %1006
    %1010 = vset.pattern.permute.xlu0 0
    %1011 = vperm.xlu0 %1010, %v885
    %v1012 = vpop.permute.xlu0 %1011
    %1015 = vset.pattern.permute.xlu0 0
    %1016 = vperm.xlu0 %1015, %v886
    %v1017 = vpop.permute.xlu0 %1016
    %1020 = vset.pattern.permute.xlu0 0
    %1021 = vperm.xlu0 %1020, %v887
    %v1022 = vpop.permute.xlu0 %1021
    %1025 = vset.pattern.permute.xlu0 0
    %1026 = vperm.xlu0 %1025, %v888
    %v1027 = vpop.permute.xlu0 %1026
    %1030 = vset.pattern.permute.xlu0 0
    %1031 = vperm.xlu0 %1030, %v889
    %v1032 = vpop.permute.xlu0 %1031
    %1035 = vset.pattern.permute.xlu0 0
    %1036 = vperm.xlu0 %1035, %v890
    %v1037 = vpop.permute.xlu0 %1036
    %1040 = vset.pattern.permute.xlu0 0
    %1041 = vperm.xlu0 %1040, %v891
    %v1042 = vpop.permute.xlu0 %1041
    %1045 = vset.pattern.permute.xlu0 0
    %1046 = vperm.xlu0 %1045, %v892
    %v1047 = vpop.permute.xlu0 %1046
    %1050 = vset.pattern.permute.xlu0 0
    %1051 = vperm.xlu0 %1050, %v893
    %v1052 = vpop.permute.xlu0 %1051
    %1055 = vset.pattern.permute.xlu0 0
    %1056 = vperm.xlu0 %1055, %v894
    %v1057 = vpop.permute.xlu0 %1056
    %1060 = vset.pattern.permute.xlu0 0
    %1061 = vperm.xlu0 %1060, %v895
    %v1062 = vpop.permute.xlu0 %1061
    %1065 = vset.pattern.permute.xlu0 0
    %1066 = vperm.xlu0 %1065, %v896
    %v1067 = vpop.permute.xlu0 %1066
    %1070 = vset.pattern.permute.xlu0 0
    %1071 = vperm.xlu0 %1070, %v897
    %v1072 = vpop.permute.xlu0 %1071
    %1075 = vset.pattern.permute.xlu0 0
    %1076 = vperm.xlu0 %1075, %v898
    %v1077 = vpop.permute.xlu0 %1076
    %1080 = vset.pattern.permute.xlu0 0
    %1081 = vperm.xlu0 %1080, %v899
    %v1082 = vpop.permute.xlu0 %1081
    %1085 = vset.pattern.permute.xlu0 0
    %1086 = vperm.xlu0 %1085, %v900
    %v1087 = vpop.permute.xlu0 %1086
    %1090 = vset.pattern.permute.xlu0 0
    %1091 = vperm.xlu0 %1090, %v901
    %v1092 = vpop.permute.xlu0 %1091
    %1095 = vset.pattern.permute.xlu0 0
    %1096 = vperm.xlu0 %1095, %v902
    %v1097 = vpop.permute.xlu0 %1096
    %1100 = vset.pattern.permute.xlu0 0
    %1101 = vperm.xlu0 %1100, %v903
    %v1102 = vpop.permute.xlu0 %1101
    %1105 = vset.pattern.permute.xlu0 0
    %1106 = vperm.xlu0 %1105, %v904
    %v1107 = vpop.permute.xlu0 %1106
    %1110 = vset.pattern.permute.xlu0 0
    %1111 = vperm.xlu0 %1110, %v905
    %v1112 = vpop.permute.xlu0 %1111
    %1115 = vset.pattern.permute.xlu0 0
    %1116 = vperm.xlu0 %1115, %v906
    %v1117 = vpop.permute.xlu0 %1116
    %1120 = vset.pattern.permute.xlu0 0
    %1121 = vperm.xlu0 %1120, %v907
    %v1122 = vpop.permute.xlu0 %1121
    %1125 = vset.pattern.permute.xlu0 0
    %1126 = vperm.xlu0 %1125, %v908
    %v1127 = vpop.permute.xlu0 %1126
    %1130 = vset.pattern.permute.xlu0 0
    %1131 = vperm.xlu0 %1130, %v909
    %v1132 = vpop.permute.xlu0 %1131
    %1135 = vset.pattern.permute.xlu0 0
    %1136 = vperm.xlu0 %1135, %v910
    %v1137 = vpop.permute.xlu0 %1136
    %1140 = vset.pattern.permute.xlu0 0
    %1141 = vperm.xlu0 %1140, %v911
    %v1142 = vpop.permute.xlu0 %1141
    %1145 = vset.pattern.permute.xlu0 0
    %1146 = vperm.xlu0 %1145, %v912
    %v1147 = vpop.permute.xlu0 %1146
    %1150 = vset.pattern.permute.xlu0 0
    %1151 = vperm.xlu0 %1150, %v913
    %v1152 = vpop.permute.xlu0 %1151
    %1155 = vset.pattern.permute.xlu0 0
    %1156 = vperm.xlu0 %1155, %v914
    %v1157 = vpop.permute.xlu0 %1156
    %1160 = vset.pattern.permute.xlu0 0
    %1161 = vperm.xlu0 %1160, %v915
    %v1162 = vpop.permute.xlu0 %1161
    %1165 = vset.pattern.permute.xlu0 0
    %1166 = vperm.xlu0 %1165, %v916
    %v1167 = vpop.permute.xlu0 %1166
    %1170 = vset.pattern.permute.xlu0 0
    %1171 = vperm.xlu0 %1170, %v917
    %v1172 = vpop.permute.xlu0 %1171
    %1175 = vset.pattern.permute.xlu0 0
    %1176 = vperm.xlu0 %1175, %v918
    %v1177 = vpop.permute.xlu0 %1176
    %1180 = vset.pattern.permute.xlu0 0
    %1181 = vperm.xlu0 %1180, %v919
    %v1182 = vpop.permute.xlu0 %1181
    %1185 = vset.pattern.permute.xlu0 0
    %1186 = vperm.xlu0 %1185, %v920
    %v1187 = vpop.permute.xlu0 %1186
    %1190 = vset.pattern.permute.xlu0 0
    %1191 = vperm.xlu0 %1190, %v921
    %v1192 = vpop.permute.xlu0 %1191
    %1195 = vset.pattern.permute.xlu0 0
    %1196 = vperm.xlu0 %1195, %v922
    %v1197 = vpop.permute.xlu0 %1196
    %1200 = vset.pattern.permute.xlu0 0
    %1201 = vperm.xlu0 %1200, %v923
    %v1202 = vpop.permute.xlu0 %1201
    %1205 = vset.pattern.permute.xlu0 0
    %1206 = vperm.xlu0 %1205, %v924
    %v1207 = vpop.permute.xlu0 %1206
    %1210 = vset.pattern.permute.xlu0 0
    %1211 = vperm.xlu0 %1210, %v925
    %v1212 = vpop.permute.xlu0 %1211
    %1215 = vset.pattern.permute.xlu0 0
    %1216 = vperm.xlu0 %1215, %v926
    %v1217 = vpop.permute.xlu0 %1216
    %1220 = vset.pattern.permute.xlu0 0
    %1221 = vperm.xlu0 %1220, %v927
    %v1222 = vpop.permute.xlu0 %1221
    %1225 = vset.pattern.permute.xlu0 0
    %1226 = vperm.xlu0 %1225, %v928
    %v1227 = vpop.permute.xlu0 %1226
    %1230 = vset.pattern.permute.xlu0 0
    %1231 = vperm.xlu0 %1230, %v929
    %v1232 = vpop.permute.xlu0 %1231
    %1235 = vset.pattern.permute.xlu0 0
    %1236 = vperm.xlu0 %1235, %v930
    %v1237 = vpop.permute.xlu0 %1236
    %1240 = vset.pattern.permute.xlu0 0
    %1241 = vperm.xlu0 %1240, %v931
    %v1242 = vpop.permute.xlu0 %1241
    %1245 = vset.pattern.permute.xlu0 0
    %1246 = vperm.xlu0 %1245, %v932
    %v1247 = vpop.permute.xlu0 %1246
    %1250 = vset.pattern.permute.xlu0 0
    %1251 = vperm.xlu0 %1250, %v933
    %v1252 = vpop.permute.xlu0 %1251
    %v1254 = vmul.f32 %v868, %v937
    %v1255 = vmul.f32 %v867, %v942
    %v1256 = vmul.f32 %v866, %v947
    %v1257 = vmul.f32 %v865, %v952
    %v1258 = vmul.f32 %v864, %v957
    %v1259 = vmul.f32 %v863, %v962
    %v1260 = vmul.f32 %v862, %v967
    %v1261 = vmul.f32 %v861, %v972
    %v1262 = vmul.f32 %v860, %v977
    %v1263 = vmul.f32 %v859, %v982
    %v1264 = vmul.f32 %v858, %v987
    %v1265 = vmul.f32 %v857, %v992
    %v1266 = vmul.f32 %v856, %v997
    %v1267 = vmul.f32 %v855, %v1002
    %v1268 = vmul.f32 %v854, %v1007
    %v1269 = vmul.f32 %v853, %v1012
    %v1270 = vmul.f32 %v852, %v1017
    %v1271 = vmul.f32 %v851, %v1022
    %v1272 = vmul.f32 %v850, %v1027
    %v1273 = vmul.f32 %v849, %v1032
    %v1274 = vmul.f32 %v848, %v1037
    %v1275 = vmul.f32 %v847, %v1042
    %v1276 = vmul.f32 %v846, %v1047
    %v1277 = vmul.f32 %v845, %v1052
    %v1278 = vmul.f32 %v844, %v1057
    %v1279 = vmul.f32 %v843, %v1062
    %v1280 = vmul.f32 %v842, %v1067
    %v1281 = vmul.f32 %v841, %v1072
    %v1282 = vmul.f32 %v840, %v1077
    %v1283 = vmul.f32 %v839, %v1082
    %v1284 = vmul.f32 %v838, %v1087
    %v1285 = vmul.f32 %v837, %v1092
    %v1286 = vmul.f32 %v836, %v1097
    %v1287 = vmul.f32 %v835, %v1102
    %v1288 = vmul.f32 %v834, %v1107
    %v1289 = vmul.f32 %v833, %v1112
    %v1290 = vmul.f32 %v832, %v1117
    %v1291 = vmul.f32 %v831, %v1122
    %v1292 = vmul.f32 %v830, %v1127
    %v1293 = vmul.f32 %v829, %v1132
    %v1294 = vmul.f32 %v828, %v1137
    %v1295 = vmul.f32 %v827, %v1142
    %v1296 = vmul.f32 %v826, %v1147
    %v1297 = vmul.f32 %v825, %v1152
    %v1298 = vmul.f32 %v824, %v1157
    %v1299 = vmul.f32 %v823, %v1162
    %v1300 = vmul.f32 %v822, %v1167
    %v1301 = vmul.f32 %v821, %v1172
    %v1302 = vmul.f32 %v820, %v1177
    %v1303 = vmul.f32 %v819, %v1182
    %v1304 = vmul.f32 %v818, %v1187
    %v1305 = vmul.f32 %v817, %v1192
    %v1306 = vmul.f32 %v816, %v1197
    %v1307 = vmul.f32 %v815, %v1202
    %v1308 = vmul.f32 %v814, %v1207
    %v1309 = vmul.f32 %v813, %v1212
    %v1310 = vmul.f32 %v812, %v1217
    %v1311 = vmul.f32 %v811, %v1222
    %v1312 = vmul.f32 %v810, %v1227
    %v1313 = vmul.f32 %v809, %v1232
    %v1314 = vmul.f32 %v808, %v1237
    %v1315 = vmul.f32 %v807, %v1242
    %v1316 = vmul.f32 %v806, %v1247
    %v1317 = vmul.f32 %v869, %v1252
    %v1318 = vlaneseq
    %v1319 = vshrl.u32 %v1318, 7
    %v1320 = vsub.s32 0, %v1319
    %v1321 = vrot.slane %v159, %v1320
    %v1322 = vmul.f32 %v1321, %v677
    %v1323 = vmul.f32 %v1321, %v678
    %v1324 = vmul.f32 %v1321, %v679
    %v1325 = vmul.f32 %v1321, %v680
    %v1326 = vmul.f32 %v1321, %v681
    %v1327 = vmul.f32 %v1321, %v682
    %v1328 = vmul.f32 %v1321, %v683
    %v1329 = vmul.f32 %v1321, %v684
    %v1330 = vmul.f32 %v1321, %v685
    %v1331 = vmul.f32 %v1321, %v686
    %v1332 = vmul.f32 %v1321, %v687
    %v1333 = vmul.f32 %v1321, %v688
    %v1334 = vmul.f32 %v1321, %v689
    %v1335 = vmul.f32 %v1321, %v690
    %v1336 = vmul.f32 %v1321, %v691
    %v1337 = vmul.f32 %v1321, %v692
    %v1338 = vmul.f32 %v1321, %v693
    %v1339 = vmul.f32 %v1321, %v694
    %v1340 = vmul.f32 %v1321, %v695
    %v1341 = vmul.f32 %v1321, %v696
    %v1342 = vmul.f32 %v1321, %v697
    %v1343 = vmul.f32 %v1321, %v698
    %v1344 = vmul.f32 %v1321, %v699
    %v1345 = vmul.f32 %v1321, %v700
    %v1346 = vmul.f32 %v1321, %v701
    %v1347 = vmul.f32 %v1321, %v702
    %v1348 = vmul.f32 %v1321, %v703
    %v1349 = vmul.f32 %v1321, %v704
    %v1350 = vmul.f32 %v1321, %v705
    %v1351 = vmul.f32 %v1321, %v706
    %v1352 = vmul.f32 %v1321, %v707
    %v1353 = vmul.f32 %v1321, %v708
    %v1354 = vmul.f32 %v1321, %v709
    %v1355 = vmul.f32 %v1321, %v710
    %v1356 = vmul.f32 %v1321, %v711
    %v1357 = vmul.f32 %v1321, %v712
    %v1358 = vmul.f32 %v1321, %v713
    %v1359 = vmul.f32 %v1321, %v714
    %v1360 = vmul.f32 %v1321, %v715
    %v1361 = vmul.f32 %v1321, %v716
    %v1362 = vmul.f32 %v1321, %v717
    %v1363 = vmul.f32 %v1321, %v718
    %v1364 = vmul.f32 %v1321, %v719
    %v1365 = vmul.f32 %v1321, %v720
    %v1366 = vmul.f32 %v1321, %v721
    %v1367 = vmul.f32 %v1321, %v722
    %v1368 = vmul.f32 %v1321, %v723
    %v1369 = vmul.f32 %v1321, %v724
    %v1370 = vmul.f32 %v1321, %v725
    %v1371 = vmul.f32 %v1321, %v726
    %v1372 = vmul.f32 %v1321, %v727
    %v1373 = vmul.f32 %v1321, %v728
    %v1374 = vmul.f32 %v1321, %v729
    %v1375 = vmul.f32 %v1321, %v730
    %v1376 = vmul.f32 %v1321, %v731
    %v1377 = vmul.f32 %v1321, %v732
    %v1378 = vmul.f32 %v1321, %v733
    %v1379 = vmul.f32 %v1321, %v734
    %v1380 = vmul.f32 %v1321, %v735
    %v1381 = vmul.f32 %v1321, %v736
    %v1382 = vmul.f32 %v1321, %v737
    %v1383 = vmul.f32 %v1321, %v738
    %v1384 = vmul.f32 %v1321, %v739
    %v1385 = vmul.f32 %v1321, %v740
    %v1386 = vlaneseq
    %v1387 = vshrl.u32 %v1386, 7
    %v1388 = vsub.s32 1, %v1387
    %v1389 = vrot.slane %v159, %v1388
    %v1390 = vmul.f32 %v1389, %v95
    %v1391 = vmul.f32 %v1389, %v96
    %v1392 = vmul.f32 %v1389, %v97
    %v1393 = vmul.f32 %v1389, %v98
    %v1394 = vmul.f32 %v1389, %v99
    %v1395 = vmul.f32 %v1389, %v100
    %v1396 = vmul.f32 %v1389, %v101
    %v1397 = vmul.f32 %v1389, %v102
    %v1398 = vmul.f32 %v1389, %v103
    %v1399 = vmul.f32 %v1389, %v104
    %v1400 = vmul.f32 %v1389, %v105
    %v1401 = vmul.f32 %v1389, %v106
    %v1402 = vmul.f32 %v1389, %v107
    %v1403 = vmul.f32 %v1389, %v108
    %v1404 = vmul.f32 %v1389, %v109
    %v1405 = vmul.f32 %v1389, %v110
    %v1406 = vmul.f32 %v1389, %v111
    %v1407 = vmul.f32 %v1389, %v112
    %v1408 = vmul.f32 %v1389, %v113
    %v1409 = vmul.f32 %v1389, %v114
    %v1410 = vmul.f32 %v1389, %v115
    %v1411 = vmul.f32 %v1389, %v116
    %v1412 = vmul.f32 %v1389, %v117
    %v1413 = vmul.f32 %v1389, %v118
    %v1414 = vmul.f32 %v1389, %v119
    %v1415 = vmul.f32 %v1389, %v120
    %v1416 = vmul.f32 %v1389, %v121
    %v1417 = vmul.f32 %v1389, %v122
    %v1418 = vmul.f32 %v1389, %v123
    %v1419 = vmul.f32 %v1389, %v124
    %v1420 = vmul.f32 %v1389, %v125
    %v1421 = vmul.f32 %v1389, %v126
    %v1422 = vmul.f32 %v1389, %v127
    %v1423 = vmul.f32 %v1389, %v128
    %v1424 = vmul.f32 %v1389, %v129
    %v1425 = vmul.f32 %v1389, %v130
    %v1426 = vmul.f32 %v1389, %v131
    %v1427 = vmul.f32 %v1389, %v132
    %v1428 = vmul.f32 %v1389, %v133
    %v1429 = vmul.f32 %v1389, %v134
    %v1430 = vmul.f32 %v1389, %v135
    %v1431 = vmul.f32 %v1389, %v136
    %v1432 = vmul.f32 %v1389, %v137
    %v1433 = vmul.f32 %v1389, %v138
    %v1434 = vmul.f32 %v1389, %v139
    %v1435 = vmul.f32 %v1389, %v140
    %v1436 = vmul.f32 %v1389, %v141
    %v1437 = vmul.f32 %v1389, %v142
    %v1438 = vmul.f32 %v1389, %v143
    %v1439 = vmul.f32 %v1389, %v144
    %v1440 = vmul.f32 %v1389, %v145
    %v1441 = vmul.f32 %v1389, %v146
    %v1442 = vmul.f32 %v1389, %v147
    %v1443 = vmul.f32 %v1389, %v148
    %v1444 = vmul.f32 %v1389, %v149
    %v1445 = vmul.f32 %v1389, %v150
    %v1446 = vmul.f32 %v1389, %v151
    %v1447 = vmul.f32 %v1389, %v152
    %v1448 = vmul.f32 %v1389, %v153
    %v1449 = vmul.f32 %v1389, %v154
    %v1450 = vmul.f32 %v1389, %v155
    %v1451 = vmul.f32 %v1389, %v156
    %v1452 = vmul.f32 %v1389, %v157
    %v1453 = vmul.f32 %v1389, %v158
    %v1454 = vadd.f32 %v1322, %v1390
    %v1455 = vadd.f32 %v1323, %v1391
    %v1456 = vadd.f32 %v1324, %v1392
    %v1457 = vadd.f32 %v1325, %v1393
    %v1458 = vadd.f32 %v1326, %v1394
    %v1459 = vadd.f32 %v1327, %v1395
    %v1460 = vadd.f32 %v1328, %v1396
    %v1461 = vadd.f32 %v1329, %v1397
    %v1462 = vadd.f32 %v1330, %v1398
    %v1463 = vadd.f32 %v1331, %v1399
    %v1464 = vadd.f32 %v1332, %v1400
    %v1465 = vadd.f32 %v1333, %v1401
    %v1466 = vadd.f32 %v1334, %v1402
    %v1467 = vadd.f32 %v1335, %v1403
    %v1468 = vadd.f32 %v1336, %v1404
    %v1469 = vadd.f32 %v1337, %v1405
    %v1470 = vadd.f32 %v1338, %v1406
    %v1471 = vadd.f32 %v1339, %v1407
    %v1472 = vadd.f32 %v1340, %v1408
    %v1473 = vadd.f32 %v1341, %v1409
    %v1474 = vadd.f32 %v1342, %v1410
    %v1475 = vadd.f32 %v1343, %v1411
    %v1476 = vadd.f32 %v1344, %v1412
    %v1477 = vadd.f32 %v1345, %v1413
    %v1478 = vadd.f32 %v1346, %v1414
    %v1479 = vadd.f32 %v1347, %v1415
    %v1480 = vadd.f32 %v1348, %v1416
    %v1481 = vadd.f32 %v1349, %v1417
    %v1482 = vadd.f32 %v1350, %v1418
    %v1483 = vadd.f32 %v1351, %v1419
    %v1484 = vadd.f32 %v1352, %v1420
    %v1485 = vadd.f32 %v1353, %v1421
    %v1486 = vadd.f32 %v1354, %v1422
    %v1487 = vadd.f32 %v1355, %v1423
    %v1488 = vadd.f32 %v1356, %v1424
    %v1489 = vadd.f32 %v1357, %v1425
    %v1490 = vadd.f32 %v1358, %v1426
    %v1491 = vadd.f32 %v1359, %v1427
    %v1492 = vadd.f32 %v1360, %v1428
    %v1493 = vadd.f32 %v1361, %v1429
    %v1494 = vadd.f32 %v1362, %v1430
    %v1495 = vadd.f32 %v1363, %v1431
    %v1496 = vadd.f32 %v1364, %v1432
    %v1497 = vadd.f32 %v1365, %v1433
    %v1498 = vadd.f32 %v1366, %v1434
    %v1499 = vadd.f32 %v1367, %v1435
    %v1500 = vadd.f32 %v1368, %v1436
    %v1501 = vadd.f32 %v1369, %v1437
    %v1502 = vadd.f32 %v1370, %v1438
    %v1503 = vadd.f32 %v1371, %v1439
    %v1504 = vadd.f32 %v1372, %v1440
    %v1505 = vadd.f32 %v1373, %v1441
    %v1506 = vadd.f32 %v1374, %v1442
    %v1507 = vadd.f32 %v1375, %v1443
    %v1508 = vadd.f32 %v1376, %v1444
    %v1509 = vadd.f32 %v1377, %v1445
    %v1510 = vadd.f32 %v1378, %v1446
    %v1511 = vadd.f32 %v1379, %v1447
    %v1512 = vadd.f32 %v1380, %v1448
    %v1513 = vadd.f32 %v1381, %v1449
    %v1514 = vadd.f32 %v1382, %v1450
    %v1515 = vadd.f32 %v1383, %v1451
    %v1516 = vadd.f32 %v1384, %v1452
    %v1517 = vadd.f32 %v1385, %v1453
    %v1518 = vlaneseq
    %v1519 = vshrl.u32 %v1518, 7
    %v1520 = vsub.s32 2, %v1519
    %v1521 = vrot.slane %v159, %v1520
    %v1522 = vmul.f32 %v1521, %v1254
    %v1523 = vmul.f32 %v1521, %v1255
    %v1524 = vmul.f32 %v1521, %v1256
    %v1525 = vmul.f32 %v1521, %v1257
    %v1526 = vmul.f32 %v1521, %v1258
    %v1527 = vmul.f32 %v1521, %v1259
    %v1528 = vmul.f32 %v1521, %v1260
    %v1529 = vmul.f32 %v1521, %v1261
    %v1530 = vmul.f32 %v1521, %v1262
    %v1531 = vmul.f32 %v1521, %v1263
    %v1532 = vmul.f32 %v1521, %v1264
    %v1533 = vmul.f32 %v1521, %v1265
    %v1534 = vmul.f32 %v1521, %v1266
    %v1535 = vmul.f32 %v1521, %v1267
    %v1536 = vmul.f32 %v1521, %v1268
    %v1537 = vmul.f32 %v1521, %v1269
    %v1538 = vmul.f32 %v1521, %v1270
    %v1539 = vmul.f32 %v1521, %v1271
    %v1540 = vmul.f32 %v1521, %v1272
    %v1541 = vmul.f32 %v1521, %v1273
    %v1542 = vmul.f32 %v1521, %v1274
    %v1543 = vmul.f32 %v1521, %v1275
    %v1544 = vmul.f32 %v1521, %v1276
    %v1545 = vmul.f32 %v1521, %v1277
    %v1546 = vmul.f32 %v1521, %v1278
    %v1547 = vmul.f32 %v1521, %v1279
    %v1548 = vmul.f32 %v1521, %v1280
    %v1549 = vmul.f32 %v1521, %v1281
    %v1550 = vmul.f32 %v1521, %v1282
    %v1551 = vmul.f32 %v1521, %v1283
    %v1552 = vmul.f32 %v1521, %v1284
    %v1553 = vmul.f32 %v1521, %v1285
    %v1554 = vmul.f32 %v1521, %v1286
    %v1555 = vmul.f32 %v1521, %v1287
    %v1556 = vmul.f32 %v1521, %v1288
    %v1557 = vmul.f32 %v1521, %v1289
    %v1558 = vmul.f32 %v1521, %v1290
    %v1559 = vmul.f32 %v1521, %v1291
    %v1560 = vmul.f32 %v1521, %v1292
    %v1561 = vmul.f32 %v1521, %v1293
    %v1562 = vmul.f32 %v1521, %v1294
    %v1563 = vmul.f32 %v1521, %v1295
    %v1564 = vmul.f32 %v1521, %v1296
    %v1565 = vmul.f32 %v1521, %v1297
    %v1566 = vmul.f32 %v1521, %v1298
    %v1567 = vmul.f32 %v1521, %v1299
    %v1568 = vmul.f32 %v1521, %v1300
    %v1569 = vmul.f32 %v1521, %v1301
    %v1570 = vmul.f32 %v1521, %v1302
    %v1571 = vmul.f32 %v1521, %v1303
    %v1572 = vmul.f32 %v1521, %v1304
    %v1573 = vmul.f32 %v1521, %v1305
    %v1574 = vmul.f32 %v1521, %v1306
    %v1575 = vmul.f32 %v1521, %v1307
    %v1576 = vmul.f32 %v1521, %v1308
    %v1577 = vmul.f32 %v1521, %v1309
    %v1578 = vmul.f32 %v1521, %v1310
    %v1579 = vmul.f32 %v1521, %v1311
    %v1580 = vmul.f32 %v1521, %v1312
    %v1581 = vmul.f32 %v1521, %v1313
    %v1582 = vmul.f32 %v1521, %v1314
    %v1583 = vmul.f32 %v1521, %v1315
    %v1584 = vmul.f32 %v1521, %v1316
    %v1585 = vmul.f32 %v1521, %v1317
    %v1586 = vadd.f32 %v1454, %v1522
    %v1587 = vadd.f32 %v1455, %v1523
    %v1588 = vadd.f32 %v1456, %v1524
    %v1589 = vadd.f32 %v1457, %v1525
    %v1590 = vadd.f32 %v1458, %v1526
    %v1591 = vadd.f32 %v1459, %v1527
    %v1592 = vadd.f32 %v1460, %v1528
    %v1593 = vadd.f32 %v1461, %v1529
    %v1594 = vadd.f32 %v1462, %v1530
    %v1595 = vadd.f32 %v1463, %v1531
    %v1596 = vadd.f32 %v1464, %v1532
    %v1597 = vadd.f32 %v1465, %v1533
    %v1598 = vadd.f32 %v1466, %v1534
    %v1599 = vadd.f32 %v1467, %v1535
    %v1600 = vadd.f32 %v1468, %v1536
    %v1601 = vadd.f32 %v1469, %v1537
    %v1602 = vadd.f32 %v1470, %v1538
    %v1603 = vadd.f32 %v1471, %v1539
    %v1604 = vadd.f32 %v1472, %v1540
    %v1605 = vadd.f32 %v1473, %v1541
    %v1606 = vadd.f32 %v1474, %v1542
    %v1607 = vadd.f32 %v1475, %v1543
    %v1608 = vadd.f32 %v1476, %v1544
    %v1609 = vadd.f32 %v1477, %v1545
    %v1610 = vadd.f32 %v1478, %v1546
    %v1611 = vadd.f32 %v1479, %v1547
    %v1612 = vadd.f32 %v1480, %v1548
    %v1613 = vadd.f32 %v1481, %v1549
    %v1614 = vadd.f32 %v1482, %v1550
    %v1615 = vadd.f32 %v1483, %v1551
    %v1616 = vadd.f32 %v1484, %v1552
    %v1617 = vadd.f32 %v1485, %v1553
    %v1618 = vadd.f32 %v1486, %v1554
    %v1619 = vadd.f32 %v1487, %v1555
    %v1620 = vadd.f32 %v1488, %v1556
    %v1621 = vadd.f32 %v1489, %v1557
    %v1622 = vadd.f32 %v1490, %v1558
    %v1623 = vadd.f32 %v1491, %v1559
    %v1624 = vadd.f32 %v1492, %v1560
    %v1625 = vadd.f32 %v1493, %v1561
    %v1626 = vadd.f32 %v1494, %v1562
    %v1627 = vadd.f32 %v1495, %v1563
    %v1628 = vadd.f32 %v1496, %v1564
    %v1629 = vadd.f32 %v1497, %v1565
    %v1630 = vadd.f32 %v1498, %v1566
    %v1631 = vadd.f32 %v1499, %v1567
    %v1632 = vadd.f32 %v1500, %v1568
    %v1633 = vadd.f32 %v1501, %v1569
    %v1634 = vadd.f32 %v1502, %v1570
    %v1635 = vadd.f32 %v1503, %v1571
    %v1636 = vadd.f32 %v1504, %v1572
    %v1637 = vadd.f32 %v1505, %v1573
    %v1638 = vadd.f32 %v1506, %v1574
    %v1639 = vadd.f32 %v1507, %v1575
    %v1640 = vadd.f32 %v1508, %v1576
    %v1641 = vadd.f32 %v1509, %v1577
    %v1642 = vadd.f32 %v1510, %v1578
    %v1643 = vadd.f32 %v1511, %v1579
    %v1644 = vadd.f32 %v1512, %v1580
    %v1645 = vadd.f32 %v1513, %v1581
    %v1646 = vadd.f32 %v1514, %v1582
    %v1647 = vadd.f32 %v1515, %v1583
    %v1648 = vadd.f32 %v1516, %v1584
    %v1649 = vadd.f32 %v1517, %v1585
    %v1650 = vlaneseq
    %v1651 = vshrl.u32 %v1650, 7
    %v1652 = vsub.s32 3, %v1651
    %v1653 = vrot.slane %v159, %v1652
    %v1654 = vmul.f32 %v1653, %v677
    %v1655 = vmul.f32 %v1653, %v678
    %v1656 = vmul.f32 %v1653, %v679
    %v1657 = vmul.f32 %v1653, %v680
    %v1658 = vmul.f32 %v1653, %v681
    %v1659 = vmul.f32 %v1653, %v682
    %v1660 = vmul.f32 %v1653, %v683
    %v1661 = vmul.f32 %v1653, %v684
    %v1662 = vmul.f32 %v1653, %v685
    %v1663 = vmul.f32 %v1653, %v686
    %v1664 = vmul.f32 %v1653, %v687
    %v1665 = vmul.f32 %v1653, %v688
    %v1666 = vmul.f32 %v1653, %v689
    %v1667 = vmul.f32 %v1653, %v690
    %v1668 = vmul.f32 %v1653, %v691
    %v1669 = vmul.f32 %v1653, %v692
    %v1670 = vmul.f32 %v1653, %v693
    %v1671 = vmul.f32 %v1653, %v694
    %v1672 = vmul.f32 %v1653, %v695
    %v1673 = vmul.f32 %v1653, %v696
    %v1674 = vmul.f32 %v1653, %v697
    %v1675 = vmul.f32 %v1653, %v698
    %v1676 = vmul.f32 %v1653, %v699
    %v1677 = vmul.f32 %v1653, %v700
    %v1678 = vmul.f32 %v1653, %v701
    %v1679 = vmul.f32 %v1653, %v702
    %v1680 = vmul.f32 %v1653, %v703
    %v1681 = vmul.f32 %v1653, %v704
    %v1682 = vmul.f32 %v1653, %v705
    %v1683 = vmul.f32 %v1653, %v706
    %v1684 = vmul.f32 %v1653, %v707
    %v1685 = vmul.f32 %v1653, %v708
    %v1686 = vmul.f32 %v1653, %v709
    %v1687 = vmul.f32 %v1653, %v710
    %v1688 = vmul.f32 %v1653, %v711
    %v1689 = vmul.f32 %v1653, %v712
    %v1690 = vmul.f32 %v1653, %v713
    %v1691 = vmul.f32 %v1653, %v714
    %v1692 = vmul.f32 %v1653, %v715
    %v1693 = vmul.f32 %v1653, %v716
    %v1694 = vmul.f32 %v1653, %v717
    %v1695 = vmul.f32 %v1653, %v718
    %v1696 = vmul.f32 %v1653, %v719
    %v1697 = vmul.f32 %v1653, %v720
    %v1698 = vmul.f32 %v1653, %v721
    %v1699 = vmul.f32 %v1653, %v722
    %v1700 = vmul.f32 %v1653, %v723
    %v1701 = vmul.f32 %v1653, %v724
    %v1702 = vmul.f32 %v1653, %v725
    %v1703 = vmul.f32 %v1653, %v726
    %v1704 = vmul.f32 %v1653, %v727
    %v1705 = vmul.f32 %v1653, %v728
    %v1706 = vmul.f32 %v1653, %v729
    %v1707 = vmul.f32 %v1653, %v730
    %v1708 = vmul.f32 %v1653, %v731
    %v1709 = vmul.f32 %v1653, %v732
    %v1710 = vmul.f32 %v1653, %v733
    %v1711 = vmul.f32 %v1653, %v734
    %v1712 = vmul.f32 %v1653, %v735
    %v1713 = vmul.f32 %v1653, %v736
    %v1714 = vmul.f32 %v1653, %v737
    %v1715 = vmul.f32 %v1653, %v738
    %v1716 = vmul.f32 %v1653, %v739
    %v1717 = vmul.f32 %v1653, %v740
    %v1719 = vlaneseq
    %v1720 = vshrl.u32 %v1719, 7
    %v1721 = vsub.s32 0, %v1720
    %v1722 = vrot.slane %v161, %v1721
    %v1724 = vadd.f32 %v1722, %v1654
    %v1725 = vadd.f32 %v1722, %v1655
    %v1726 = vadd.f32 %v1722, %v1656
    %v1727 = vadd.f32 %v1722, %v1657
    %v1728 = vadd.f32 %v1722, %v1658
    %v1729 = vadd.f32 %v1722, %v1659
    %v1730 = vadd.f32 %v1722, %v1660
    %v1731 = vadd.f32 %v1722, %v1661
    %v1732 = vadd.f32 %v1722, %v1662
    %v1733 = vadd.f32 %v1722, %v1663
    %v1734 = vadd.f32 %v1722, %v1664
    %v1735 = vadd.f32 %v1722, %v1665
    %v1736 = vadd.f32 %v1722, %v1666
    %v1737 = vadd.f32 %v1722, %v1667
    %v1738 = vadd.f32 %v1722, %v1668
    %v1739 = vadd.f32 %v1722, %v1669
    %v1740 = vadd.f32 %v1722, %v1670
    %v1741 = vadd.f32 %v1722, %v1671
    %v1742 = vadd.f32 %v1722, %v1672
    %v1743 = vadd.f32 %v1722, %v1673
    %v1744 = vadd.f32 %v1722, %v1674
    %v1745 = vadd.f32 %v1722, %v1675
    %v1746 = vadd.f32 %v1722, %v1676
    %v1747 = vadd.f32 %v1722, %v1677
    %v1748 = vadd.f32 %v1722, %v1678
    %v1749 = vadd.f32 %v1722, %v1679
    %v1750 = vadd.f32 %v1722, %v1680
    %v1751 = vadd.f32 %v1722, %v1681
    %v1752 = vadd.f32 %v1722, %v1682
    %v1753 = vadd.f32 %v1722, %v1683
    %v1754 = vadd.f32 %v1722, %v1684
    %v1755 = vadd.f32 %v1722, %v1685
    %v1756 = vadd.f32 %v1722, %v1686
    %v1757 = vadd.f32 %v1722, %v1687
    %v1758 = vadd.f32 %v1722, %v1688
    %v1759 = vadd.f32 %v1722, %v1689
    %v1760 = vadd.f32 %v1722, %v1690
    %v1761 = vadd.f32 %v1722, %v1691
    %v1762 = vadd.f32 %v1722, %v1692
    %v1763 = vadd.f32 %v1722, %v1693
    %v1764 = vadd.f32 %v1722, %v1694
    %v1765 = vadd.f32 %v1722, %v1695
    %v1766 = vadd.f32 %v1722, %v1696
    %v1767 = vadd.f32 %v1722, %v1697
    %v1768 = vadd.f32 %v1722, %v1698
    %v1769 = vadd.f32 %v1722, %v1699
    %v1770 = vadd.f32 %v1722, %v1700
    %v1771 = vadd.f32 %v1722, %v1701
    %v1772 = vadd.f32 %v1722, %v1702
    %v1773 = vadd.f32 %v1722, %v1703
    %v1774 = vadd.f32 %v1722, %v1704
    %v1775 = vadd.f32 %v1722, %v1705
    %v1776 = vadd.f32 %v1722, %v1706
    %v1777 = vadd.f32 %v1722, %v1707
    %v1778 = vadd.f32 %v1722, %v1708
    %v1779 = vadd.f32 %v1722, %v1709
    %v1780 = vadd.f32 %v1722, %v1710
    %v1781 = vadd.f32 %v1722, %v1711
    %v1782 = vadd.f32 %v1722, %v1712
    %v1783 = vadd.f32 %v1722, %v1713
    %v1784 = vadd.f32 %v1722, %v1714
    %v1785 = vadd.f32 %v1722, %v1715
    %v1786 = vadd.f32 %v1722, %v1716
    %v1787 = vadd.f32 %v1722, %v1717
    %v1788 = vlaneseq
    %v1789 = vshrl.u32 %v1788, 7
    %v1790 = vsub.s32 4, %v1789
    %v1791 = vrot.slane %v159, %v1790
    %v1792 = vmul.f32 %v1791, %v95
    %v1793 = vmul.f32 %v1791, %v96
    %v1794 = vmul.f32 %v1791, %v97
    %v1795 = vmul.f32 %v1791, %v98
    %v1796 = vmul.f32 %v1791, %v99
    %v1797 = vmul.f32 %v1791, %v100
    %v1798 = vmul.f32 %v1791, %v101
    %v1799 = vmul.f32 %v1791, %v102
    %v1800 = vmul.f32 %v1791, %v103
    %v1801 = vmul.f32 %v1791, %v104
    %v1802 = vmul.f32 %v1791, %v105
    %v1803 = vmul.f32 %v1791, %v106
    %v1804 = vmul.f32 %v1791, %v107
    %v1805 = vmul.f32 %v1791, %v108
    %v1806 = vmul.f32 %v1791, %v109
    %v1807 = vmul.f32 %v1791, %v110
    %v1808 = vmul.f32 %v1791, %v111
    %v1809 = vmul.f32 %v1791, %v112
    %v1810 = vmul.f32 %v1791, %v113
    %v1811 = vmul.f32 %v1791, %v114
    %v1812 = vmul.f32 %v1791, %v115
    %v1813 = vmul.f32 %v1791, %v116
    %v1814 = vmul.f32 %v1791, %v117
    %v1815 = vmul.f32 %v1791, %v118
    %v1816 = vmul.f32 %v1791, %v119
    %v1817 = vmul.f32 %v1791, %v120
    %v1818 = vmul.f32 %v1791, %v121
    %v1819 = vmul.f32 %v1791, %v122
    %v1820 = vmul.f32 %v1791, %v123
    %v1821 = vmul.f32 %v1791, %v124
    %v1822 = vmul.f32 %v1791, %v125
    %v1823 = vmul.f32 %v1791, %v126
    %v1824 = vmul.f32 %v1791, %v127
    %v1825 = vmul.f32 %v1791, %v128
    %v1826 = vmul.f32 %v1791, %v129
    %v1827 = vmul.f32 %v1791, %v130
    %v1828 = vmul.f32 %v1791, %v131
    %v1829 = vmul.f32 %v1791, %v132
    %v1830 = vmul.f32 %v1791, %v133
    %v1831 = vmul.f32 %v1791, %v134
    %v1832 = vmul.f32 %v1791, %v135
    %v1833 = vmul.f32 %v1791, %v136
    %v1834 = vmul.f32 %v1791, %v137
    %v1835 = vmul.f32 %v1791, %v138
    %v1836 = vmul.f32 %v1791, %v139
    %v1837 = vmul.f32 %v1791, %v140
    %v1838 = vmul.f32 %v1791, %v141
    %v1839 = vmul.f32 %v1791, %v142
    %v1840 = vmul.f32 %v1791, %v143
    %v1841 = vmul.f32 %v1791, %v144
    %v1842 = vmul.f32 %v1791, %v145
    %v1843 = vmul.f32 %v1791, %v146
    %v1844 = vmul.f32 %v1791, %v147
    %v1845 = vmul.f32 %v1791, %v148
    %v1846 = vmul.f32 %v1791, %v149
    %v1847 = vmul.f32 %v1791, %v150
    %v1848 = vmul.f32 %v1791, %v151
    %v1849 = vmul.f32 %v1791, %v152
    %v1850 = vmul.f32 %v1791, %v153
    %v1851 = vmul.f32 %v1791, %v154
    %v1852 = vmul.f32 %v1791, %v155
    %v1853 = vmul.f32 %v1791, %v156
    %v1854 = vmul.f32 %v1791, %v157
    %v1855 = vmul.f32 %v1791, %v158
    %v1856 = vlaneseq
    %v1857 = vshrl.u32 %v1856, 7
    %v1858 = vsub.s32 5, %v1857
    %v1859 = vrot.slane %v159, %v1858
    %v1860 = vmul.f32 %v1859, %v1254
    %v1861 = vmul.f32 %v1859, %v1255
    %v1862 = vmul.f32 %v1859, %v1256
    %v1863 = vmul.f32 %v1859, %v1257
    %v1864 = vmul.f32 %v1859, %v1258
    %v1865 = vmul.f32 %v1859, %v1259
    %v1866 = vmul.f32 %v1859, %v1260
    %v1867 = vmul.f32 %v1859, %v1261
    %v1868 = vmul.f32 %v1859, %v1262
    %v1869 = vmul.f32 %v1859, %v1263
    %v1870 = vmul.f32 %v1859, %v1264
    %v1871 = vmul.f32 %v1859, %v1265
    %v1872 = vmul.f32 %v1859, %v1266
    %v1873 = vmul.f32 %v1859, %v1267
    %v1874 = vmul.f32 %v1859, %v1268
    %v1875 = vmul.f32 %v1859, %v1269
    %v1876 = vmul.f32 %v1859, %v1270
    %v1877 = vmul.f32 %v1859, %v1271
    %v1878 = vmul.f32 %v1859, %v1272
    %v1879 = vmul.f32 %v1859, %v1273
    %v1880 = vmul.f32 %v1859, %v1274
    %v1881 = vmul.f32 %v1859, %v1275
    %v1882 = vmul.f32 %v1859, %v1276
    %v1883 = vmul.f32 %v1859, %v1277
    %v1884 = vmul.f32 %v1859, %v1278
    %v1885 = vmul.f32 %v1859, %v1279
    %v1886 = vmul.f32 %v1859, %v1280
    %v1887 = vmul.f32 %v1859, %v1281
    %v1888 = vmul.f32 %v1859, %v1282
    %v1889 = vmul.f32 %v1859, %v1283
    %v1890 = vmul.f32 %v1859, %v1284
    %v1891 = vmul.f32 %v1859, %v1285
    %v1892 = vmul.f32 %v1859, %v1286
    %v1893 = vmul.f32 %v1859, %v1287
    %v1894 = vmul.f32 %v1859, %v1288
    %v1895 = vmul.f32 %v1859, %v1289
    %v1896 = vmul.f32 %v1859, %v1290
    %v1897 = vmul.f32 %v1859, %v1291
    %v1898 = vmul.f32 %v1859, %v1292
    %v1899 = vmul.f32 %v1859, %v1293
    %v1900 = vmul.f32 %v1859, %v1294
    %v1901 = vmul.f32 %v1859, %v1295
    %v1902 = vmul.f32 %v1859, %v1296
    %v1903 = vmul.f32 %v1859, %v1297
    %v1904 = vmul.f32 %v1859, %v1298
    %v1905 = vmul.f32 %v1859, %v1299
    %v1906 = vmul.f32 %v1859, %v1300
    %v1907 = vmul.f32 %v1859, %v1301
    %v1908 = vmul.f32 %v1859, %v1302
    %v1909 = vmul.f32 %v1859, %v1303
    %v1910 = vmul.f32 %v1859, %v1304
    %v1911 = vmul.f32 %v1859, %v1305
    %v1912 = vmul.f32 %v1859, %v1306
    %v1913 = vmul.f32 %v1859, %v1307
    %v1914 = vmul.f32 %v1859, %v1308
    %v1915 = vmul.f32 %v1859, %v1309
    %v1916 = vmul.f32 %v1859, %v1310
    %v1917 = vmul.f32 %v1859, %v1311
    %v1918 = vmul.f32 %v1859, %v1312
    %v1919 = vmul.f32 %v1859, %v1313
    %v1920 = vmul.f32 %v1859, %v1314
    %v1921 = vmul.f32 %v1859, %v1315
    %v1922 = vmul.f32 %v1859, %v1316
    %v1923 = vmul.f32 %v1859, %v1317
    %v1924 = vadd.f32 %v1792, %v1860
    %v1925 = vadd.f32 %v1793, %v1861
    %v1926 = vadd.f32 %v1794, %v1862
    %v1927 = vadd.f32 %v1795, %v1863
    %v1928 = vadd.f32 %v1796, %v1864
    %v1929 = vadd.f32 %v1797, %v1865
    %v1930 = vadd.f32 %v1798, %v1866
    %v1931 = vadd.f32 %v1799, %v1867
    %v1932 = vadd.f32 %v1800, %v1868
    %v1933 = vadd.f32 %v1801, %v1869
    %v1934 = vadd.f32 %v1802, %v1870
    %v1935 = vadd.f32 %v1803, %v1871
    %v1936 = vadd.f32 %v1804, %v1872
    %v1937 = vadd.f32 %v1805, %v1873
    %v1938 = vadd.f32 %v1806, %v1874
    %v1939 = vadd.f32 %v1807, %v1875
    %v1940 = vadd.f32 %v1808, %v1876
    %v1941 = vadd.f32 %v1809, %v1877
    %v1942 = vadd.f32 %v1810, %v1878
    %v1943 = vadd.f32 %v1811, %v1879
    %v1944 = vadd.f32 %v1812, %v1880
    %v1945 = vadd.f32 %v1813, %v1881
    %v1946 = vadd.f32 %v1814, %v1882
    %v1947 = vadd.f32 %v1815, %v1883
    %v1948 = vadd.f32 %v1816, %v1884
    %v1949 = vadd.f32 %v1817, %v1885
    %v1950 = vadd.f32 %v1818, %v1886
    %v1951 = vadd.f32 %v1819, %v1887
    %v1952 = vadd.f32 %v1820, %v1888
    %v1953 = vadd.f32 %v1821, %v1889
    %v1954 = vadd.f32 %v1822, %v1890
    %v1955 = vadd.f32 %v1823, %v1891
    %v1956 = vadd.f32 %v1824, %v1892
    %v1957 = vadd.f32 %v1825, %v1893
    %v1958 = vadd.f32 %v1826, %v1894
    %v1959 = vadd.f32 %v1827, %v1895
    %v1960 = vadd.f32 %v1828, %v1896
    %v1961 = vadd.f32 %v1829, %v1897
    %v1962 = vadd.f32 %v1830, %v1898
    %v1963 = vadd.f32 %v1831, %v1899
    %v1964 = vadd.f32 %v1832, %v1900
    %v1965 = vadd.f32 %v1833, %v1901
    %v1966 = vadd.f32 %v1834, %v1902
    %v1967 = vadd.f32 %v1835, %v1903
    %v1968 = vadd.f32 %v1836, %v1904
    %v1969 = vadd.f32 %v1837, %v1905
    %v1970 = vadd.f32 %v1838, %v1906
    %v1971 = vadd.f32 %v1839, %v1907
    %v1972 = vadd.f32 %v1840, %v1908
    %v1973 = vadd.f32 %v1841, %v1909
    %v1974 = vadd.f32 %v1842, %v1910
    %v1975 = vadd.f32 %v1843, %v1911
    %v1976 = vadd.f32 %v1844, %v1912
    %v1977 = vadd.f32 %v1845, %v1913
    %v1978 = vadd.f32 %v1846, %v1914
    %v1979 = vadd.f32 %v1847, %v1915
    %v1980 = vadd.f32 %v1848, %v1916
    %v1981 = vadd.f32 %v1849, %v1917
    %v1982 = vadd.f32 %v1850, %v1918
    %v1983 = vadd.f32 %v1851, %v1919
    %v1984 = vadd.f32 %v1852, %v1920
    %v1985 = vadd.f32 %v1853, %v1921
    %v1986 = vadd.f32 %v1854, %v1922
    %v1987 = vadd.f32 %v1855, %v1923
    %v1988 = vadd.f32 %v1724, %v1924
    %v1989 = vadd.f32 %v1725, %v1925
    %v1990 = vadd.f32 %v1726, %v1926
    %v1991 = vadd.f32 %v1727, %v1927
    %v1992 = vadd.f32 %v1728, %v1928
    %v1993 = vadd.f32 %v1729, %v1929
    %v1994 = vadd.f32 %v1730, %v1930
    %v1995 = vadd.f32 %v1731, %v1931
    %v1996 = vadd.f32 %v1732, %v1932
    %v1997 = vadd.f32 %v1733, %v1933
    %v1998 = vadd.f32 %v1734, %v1934
    %v1999 = vadd.f32 %v1735, %v1935
    %v2000 = vadd.f32 %v1736, %v1936
    %v2001 = vadd.f32 %v1737, %v1937
    %v2002 = vadd.f32 %v1738, %v1938
    %v2003 = vadd.f32 %v1739, %v1939
    %v2004 = vadd.f32 %v1740, %v1940
    %v2005 = vadd.f32 %v1741, %v1941
    %v2006 = vadd.f32 %v1742, %v1942
    %v2007 = vadd.f32 %v1743, %v1943
    %v2008 = vadd.f32 %v1744, %v1944
    %v2009 = vadd.f32 %v1745, %v1945
    %v2010 = vadd.f32 %v1746, %v1946
    %v2011 = vadd.f32 %v1747, %v1947
    %v2012 = vadd.f32 %v1748, %v1948
    %v2013 = vadd.f32 %v1749, %v1949
    %v2014 = vadd.f32 %v1750, %v1950
    %v2015 = vadd.f32 %v1751, %v1951
    %v2016 = vadd.f32 %v1752, %v1952
    %v2017 = vadd.f32 %v1753, %v1953
    %v2018 = vadd.f32 %v1754, %v1954
    %v2019 = vadd.f32 %v1755, %v1955
    %v2020 = vadd.f32 %v1756, %v1956
    %v2021 = vadd.f32 %v1757, %v1957
    %v2022 = vadd.f32 %v1758, %v1958
    %v2023 = vadd.f32 %v1759, %v1959
    %v2024 = vadd.f32 %v1760, %v1960
    %v2025 = vadd.f32 %v1761, %v1961
    %v2026 = vadd.f32 %v1762, %v1962
    %v2027 = vadd.f32 %v1763, %v1963
    %v2028 = vadd.f32 %v1764, %v1964
    %v2029 = vadd.f32 %v1765, %v1965
    %v2030 = vadd.f32 %v1766, %v1966
    %v2031 = vadd.f32 %v1767, %v1967
    %v2032 = vadd.f32 %v1768, %v1968
    %v2033 = vadd.f32 %v1769, %v1969
    %v2034 = vadd.f32 %v1770, %v1970
    %v2035 = vadd.f32 %v1771, %v1971
    %v2036 = vadd.f32 %v1772, %v1972
    %v2037 = vadd.f32 %v1773, %v1973
    %v2038 = vadd.f32 %v1774, %v1974
    %v2039 = vadd.f32 %v1775, %v1975
    %v2040 = vadd.f32 %v1776, %v1976
    %v2041 = vadd.f32 %v1777, %v1977
    %v2042 = vadd.f32 %v1778, %v1978
    %v2043 = vadd.f32 %v1779, %v1979
    %v2044 = vadd.f32 %v1780, %v1980
    %v2045 = vadd.f32 %v1781, %v1981
    %v2046 = vadd.f32 %v1782, %v1982
    %v2047 = vadd.f32 %v1783, %v1983
    %v2048 = vadd.f32 %v1784, %v1984
    %v2049 = vadd.f32 %v1785, %v1985
    %v2050 = vadd.f32 %v1786, %v1986
    %v2051 = vadd.f32 %v1787, %v1987
    %v2052 = vlaneseq
    %v2053 = vshrl.u32 %v2052, 7
    %v2054 = vsub.s32 6, %v2053
    %v2055 = vrot.slane %v159, %v2054
    %v2056 = vmul.f32 %v2055, %v677
    %v2057 = vmul.f32 %v2055, %v678
    %v2058 = vmul.f32 %v2055, %v679
    %v2059 = vmul.f32 %v2055, %v680
    %v2060 = vmul.f32 %v2055, %v681
    %v2061 = vmul.f32 %v2055, %v682
    %v2062 = vmul.f32 %v2055, %v683
    %v2063 = vmul.f32 %v2055, %v684
    %v2064 = vmul.f32 %v2055, %v685
    %v2065 = vmul.f32 %v2055, %v686
    %v2066 = vmul.f32 %v2055, %v687
    %v2067 = vmul.f32 %v2055, %v688
    %v2068 = vmul.f32 %v2055, %v689
    %v2069 = vmul.f32 %v2055, %v690
    %v2070 = vmul.f32 %v2055, %v691
    %v2071 = vmul.f32 %v2055, %v692
    %v2072 = vmul.f32 %v2055, %v693
    %v2073 = vmul.f32 %v2055, %v694
    %v2074 = vmul.f32 %v2055, %v695
    %v2075 = vmul.f32 %v2055, %v696
    %v2076 = vmul.f32 %v2055, %v697
    %v2077 = vmul.f32 %v2055, %v698
    %v2078 = vmul.f32 %v2055, %v699
    %v2079 = vmul.f32 %v2055, %v700
    %v2080 = vmul.f32 %v2055, %v701
    %v2081 = vmul.f32 %v2055, %v702
    %v2082 = vmul.f32 %v2055, %v703
    %v2083 = vmul.f32 %v2055, %v704
    %v2084 = vmul.f32 %v2055, %v705
    %v2085 = vmul.f32 %v2055, %v706
    %v2086 = vmul.f32 %v2055, %v707
    %v2087 = vmul.f32 %v2055, %v708
    %v2088 = vmul.f32 %v2055, %v709
    %v2089 = vmul.f32 %v2055, %v710
    %v2090 = vmul.f32 %v2055, %v711
    %v2091 = vmul.f32 %v2055, %v712
    %v2092 = vmul.f32 %v2055, %v713
    %v2093 = vmul.f32 %v2055, %v714
    %v2094 = vmul.f32 %v2055, %v715
    %v2095 = vmul.f32 %v2055, %v716
    %v2096 = vmul.f32 %v2055, %v717
    %v2097 = vmul.f32 %v2055, %v718
    %v2098 = vmul.f32 %v2055, %v719
    %v2099 = vmul.f32 %v2055, %v720
    %v2100 = vmul.f32 %v2055, %v721
    %v2101 = vmul.f32 %v2055, %v722
    %v2102 = vmul.f32 %v2055, %v723
    %v2103 = vmul.f32 %v2055, %v724
    %v2104 = vmul.f32 %v2055, %v725
    %v2105 = vmul.f32 %v2055, %v726
    %v2106 = vmul.f32 %v2055, %v727
    %v2107 = vmul.f32 %v2055, %v728
    %v2108 = vmul.f32 %v2055, %v729
    %v2109 = vmul.f32 %v2055, %v730
    %v2110 = vmul.f32 %v2055, %v731
    %v2111 = vmul.f32 %v2055, %v732
    %v2112 = vmul.f32 %v2055, %v733
    %v2113 = vmul.f32 %v2055, %v734
    %v2114 = vmul.f32 %v2055, %v735
    %v2115 = vmul.f32 %v2055, %v736
    %v2116 = vmul.f32 %v2055, %v737
    %v2117 = vmul.f32 %v2055, %v738
    %v2118 = vmul.f32 %v2055, %v739
    %v2119 = vmul.f32 %v2055, %v740
    %v2120 = vlaneseq
    %v2121 = vshrl.u32 %v2120, 7
    %v2122 = vsub.s32 7, %v2121
    %v2123 = vrot.slane %v159, %v2122
    %v2124 = vmul.f32 %v2123, %v95
    %v2125 = vmul.f32 %v2123, %v96
    %v2126 = vmul.f32 %v2123, %v97
    %v2127 = vmul.f32 %v2123, %v98
    %v2128 = vmul.f32 %v2123, %v99
    %v2129 = vmul.f32 %v2123, %v100
    %v2130 = vmul.f32 %v2123, %v101
    %v2131 = vmul.f32 %v2123, %v102
    %v2132 = vmul.f32 %v2123, %v103
    %v2133 = vmul.f32 %v2123, %v104
    %v2134 = vmul.f32 %v2123, %v105
    %v2135 = vmul.f32 %v2123, %v106
    %v2136 = vmul.f32 %v2123, %v107
    %v2137 = vmul.f32 %v2123, %v108
    %v2138 = vmul.f32 %v2123, %v109
    %v2139 = vmul.f32 %v2123, %v110
    %v2140 = vmul.f32 %v2123, %v111
    %v2141 = vmul.f32 %v2123, %v112
    %v2142 = vmul.f32 %v2123, %v113
    %v2143 = vmul.f32 %v2123, %v114
    %v2144 = vmul.f32 %v2123, %v115
    %v2145 = vmul.f32 %v2123, %v116
    %v2146 = vmul.f32 %v2123, %v117
    %v2147 = vmul.f32 %v2123, %v118
    %v2148 = vmul.f32 %v2123, %v119
    %v2149 = vmul.f32 %v2123, %v120
    %v2150 = vmul.f32 %v2123, %v121
    %v2151 = vmul.f32 %v2123, %v122
    %v2152 = vmul.f32 %v2123, %v123
    %v2153 = vmul.f32 %v2123, %v124
    %v2154 = vmul.f32 %v2123, %v125
    %v2155 = vmul.f32 %v2123, %v126
    %v2156 = vmul.f32 %v2123, %v127
    %v2157 = vmul.f32 %v2123, %v128
    %v2158 = vmul.f32 %v2123, %v129
    %v2159 = vmul.f32 %v2123, %v130
    %v2160 = vmul.f32 %v2123, %v131
    %v2161 = vmul.f32 %v2123, %v132
    %v2162 = vmul.f32 %v2123, %v133
    %v2163 = vmul.f32 %v2123, %v134
    %v2164 = vmul.f32 %v2123, %v135
    %v2165 = vmul.f32 %v2123, %v136
    %v2166 = vmul.f32 %v2123, %v137
    %v2167 = vmul.f32 %v2123, %v138
    %v2168 = vmul.f32 %v2123, %v139
    %v2169 = vmul.f32 %v2123, %v140
    %v2170 = vmul.f32 %v2123, %v141
    %v2171 = vmul.f32 %v2123, %v142
    %v2172 = vmul.f32 %v2123, %v143
    %v2173 = vmul.f32 %v2123, %v144
    %v2174 = vmul.f32 %v2123, %v145
    %v2175 = vmul.f32 %v2123, %v146
    %v2176 = vmul.f32 %v2123, %v147
    %v2177 = vmul.f32 %v2123, %v148
    %v2178 = vmul.f32 %v2123, %v149
    %v2179 = vmul.f32 %v2123, %v150
    %v2180 = vmul.f32 %v2123, %v151
    %v2181 = vmul.f32 %v2123, %v152
    %v2182 = vmul.f32 %v2123, %v153
    %v2183 = vmul.f32 %v2123, %v154
    %v2184 = vmul.f32 %v2123, %v155
    %v2185 = vmul.f32 %v2123, %v156
    %v2186 = vmul.f32 %v2123, %v157
    %v2187 = vmul.f32 %v2123, %v158
    %v2188 = vadd.f32 %v2056, %v2124
    %v2189 = vadd.f32 %v2057, %v2125
    %v2190 = vadd.f32 %v2058, %v2126
    %v2191 = vadd.f32 %v2059, %v2127
    %v2192 = vadd.f32 %v2060, %v2128
    %v2193 = vadd.f32 %v2061, %v2129
    %v2194 = vadd.f32 %v2062, %v2130
    %v2195 = vadd.f32 %v2063, %v2131
    %v2196 = vadd.f32 %v2064, %v2132
    %v2197 = vadd.f32 %v2065, %v2133
    %v2198 = vadd.f32 %v2066, %v2134
    %v2199 = vadd.f32 %v2067, %v2135
    %v2200 = vadd.f32 %v2068, %v2136
    %v2201 = vadd.f32 %v2069, %v2137
    %v2202 = vadd.f32 %v2070, %v2138
    %v2203 = vadd.f32 %v2071, %v2139
    %v2204 = vadd.f32 %v2072, %v2140
    %v2205 = vadd.f32 %v2073, %v2141
    %v2206 = vadd.f32 %v2074, %v2142
    %v2207 = vadd.f32 %v2075, %v2143
    %v2208 = vadd.f32 %v2076, %v2144
    %v2209 = vadd.f32 %v2077, %v2145
    %v2210 = vadd.f32 %v2078, %v2146
    %v2211 = vadd.f32 %v2079, %v2147
    %v2212 = vadd.f32 %v2080, %v2148
    %v2213 = vadd.f32 %v2081, %v2149
    %v2214 = vadd.f32 %v2082, %v2150
    %v2215 = vadd.f32 %v2083, %v2151
    %v2216 = vadd.f32 %v2084, %v2152
    %v2217 = vadd.f32 %v2085, %v2153
    %v2218 = vadd.f32 %v2086, %v2154
    %v2219 = vadd.f32 %v2087, %v2155
    %v2220 = vadd.f32 %v2088, %v2156
    %v2221 = vadd.f32 %v2089, %v2157
    %v2222 = vadd.f32 %v2090, %v2158
    %v2223 = vadd.f32 %v2091, %v2159
    %v2224 = vadd.f32 %v2092, %v2160
    %v2225 = vadd.f32 %v2093, %v2161
    %v2226 = vadd.f32 %v2094, %v2162
    %v2227 = vadd.f32 %v2095, %v2163
    %v2228 = vadd.f32 %v2096, %v2164
    %v2229 = vadd.f32 %v2097, %v2165
    %v2230 = vadd.f32 %v2098, %v2166
    %v2231 = vadd.f32 %v2099, %v2167
    %v2232 = vadd.f32 %v2100, %v2168
    %v2233 = vadd.f32 %v2101, %v2169
    %v2234 = vadd.f32 %v2102, %v2170
    %v2235 = vadd.f32 %v2103, %v2171
    %v2236 = vadd.f32 %v2104, %v2172
    %v2237 = vadd.f32 %v2105, %v2173
    %v2238 = vadd.f32 %v2106, %v2174
    %v2239 = vadd.f32 %v2107, %v2175
    %v2240 = vadd.f32 %v2108, %v2176
    %v2241 = vadd.f32 %v2109, %v2177
    %v2242 = vadd.f32 %v2110, %v2178
    %v2243 = vadd.f32 %v2111, %v2179
    %v2244 = vadd.f32 %v2112, %v2180
    %v2245 = vadd.f32 %v2113, %v2181
    %v2246 = vadd.f32 %v2114, %v2182
    %v2247 = vadd.f32 %v2115, %v2183
    %v2248 = vadd.f32 %v2116, %v2184
    %v2249 = vadd.f32 %v2117, %v2185
    %v2250 = vadd.f32 %v2118, %v2186
    %v2251 = vadd.f32 %v2119, %v2187
    %v2252 = vlaneseq
    %v2253 = vshrl.u32 %v2252, 7
    %v2254 = vsub.s32 0, %v2253
    %v2255 = vrot.slane %v160, %v2254
    %v2256 = vmul.f32 %v2255, %v1254
    %v2257 = vmul.f32 %v2255, %v1255
    %v2258 = vmul.f32 %v2255, %v1256
    %v2259 = vmul.f32 %v2255, %v1257
    %v2260 = vmul.f32 %v2255, %v1258
    %v2261 = vmul.f32 %v2255, %v1259
    %v2262 = vmul.f32 %v2255, %v1260
    %v2263 = vmul.f32 %v2255, %v1261
    %v2264 = vmul.f32 %v2255, %v1262
    %v2265 = vmul.f32 %v2255, %v1263
    %v2266 = vmul.f32 %v2255, %v1264
    %v2267 = vmul.f32 %v2255, %v1265
    %v2268 = vmul.f32 %v2255, %v1266
    %v2269 = vmul.f32 %v2255, %v1267
    %v2270 = vmul.f32 %v2255, %v1268
    %v2271 = vmul.f32 %v2255, %v1269
    %v2272 = vmul.f32 %v2255, %v1270
    %v2273 = vmul.f32 %v2255, %v1271
    %v2274 = vmul.f32 %v2255, %v1272
    %v2275 = vmul.f32 %v2255, %v1273
    %v2276 = vmul.f32 %v2255, %v1274
    %v2277 = vmul.f32 %v2255, %v1275
    %v2278 = vmul.f32 %v2255, %v1276
    %v2279 = vmul.f32 %v2255, %v1277
    %v2280 = vmul.f32 %v2255, %v1278
    %v2281 = vmul.f32 %v2255, %v1279
    %v2282 = vmul.f32 %v2255, %v1280
    %v2283 = vmul.f32 %v2255, %v1281
    %v2284 = vmul.f32 %v2255, %v1282
    %v2285 = vmul.f32 %v2255, %v1283
    %v2286 = vmul.f32 %v2255, %v1284
    %v2287 = vmul.f32 %v2255, %v1285
    %v2288 = vmul.f32 %v2255, %v1286
    %v2289 = vmul.f32 %v2255, %v1287
    %v2290 = vmul.f32 %v2255, %v1288
    %v2291 = vmul.f32 %v2255, %v1289
    %v2292 = vmul.f32 %v2255, %v1290
    %v2293 = vmul.f32 %v2255, %v1291
    %v2294 = vmul.f32 %v2255, %v1292
    %v2295 = vmul.f32 %v2255, %v1293
    %v2296 = vmul.f32 %v2255, %v1294
    %v2297 = vmul.f32 %v2255, %v1295
    %v2298 = vmul.f32 %v2255, %v1296
    %v2299 = vmul.f32 %v2255, %v1297
    %v2300 = vmul.f32 %v2255, %v1298
    %v2301 = vmul.f32 %v2255, %v1299
    %v2302 = vmul.f32 %v2255, %v1300
    %v2303 = vmul.f32 %v2255, %v1301
    %v2304 = vmul.f32 %v2255, %v1302
    %v2305 = vmul.f32 %v2255, %v1303
    %v2306 = vmul.f32 %v2255, %v1304
    %v2307 = vmul.f32 %v2255, %v1305
    %v2308 = vmul.f32 %v2255, %v1306
    %v2309 = vmul.f32 %v2255, %v1307
    %v2310 = vmul.f32 %v2255, %v1308
    %v2311 = vmul.f32 %v2255, %v1309
    %v2312 = vmul.f32 %v2255, %v1310
    %v2313 = vmul.f32 %v2255, %v1311
    %v2314 = vmul.f32 %v2255, %v1312
    %v2315 = vmul.f32 %v2255, %v1313
    %v2316 = vmul.f32 %v2255, %v1314
    %v2317 = vmul.f32 %v2255, %v1315
    %v2318 = vmul.f32 %v2255, %v1316
    %v2319 = vmul.f32 %v2255, %v1317
    %v2320 = vadd.f32 %v2188, %v2256
    %v2321 = vadd.f32 %v2189, %v2257
    %v2322 = vadd.f32 %v2190, %v2258
    %v2323 = vadd.f32 %v2191, %v2259
    %v2324 = vadd.f32 %v2192, %v2260
    %v2325 = vadd.f32 %v2193, %v2261
    %v2326 = vadd.f32 %v2194, %v2262
    %v2327 = vadd.f32 %v2195, %v2263
    %v2328 = vadd.f32 %v2196, %v2264
    %v2329 = vadd.f32 %v2197, %v2265
    %v2330 = vadd.f32 %v2198, %v2266
    %v2331 = vadd.f32 %v2199, %v2267
    %v2332 = vadd.f32 %v2200, %v2268
    %v2333 = vadd.f32 %v2201, %v2269
    %v2334 = vadd.f32 %v2202, %v2270
    %v2335 = vadd.f32 %v2203, %v2271
    %v2336 = vadd.f32 %v2204, %v2272
    %v2337 = vadd.f32 %v2205, %v2273
    %v2338 = vadd.f32 %v2206, %v2274
    %v2339 = vadd.f32 %v2207, %v2275
    %v2340 = vadd.f32 %v2208, %v2276
    %v2341 = vadd.f32 %v2209, %v2277
    %v2342 = vadd.f32 %v2210, %v2278
    %v2343 = vadd.f32 %v2211, %v2279
    %v2344 = vadd.f32 %v2212, %v2280
    %v2345 = vadd.f32 %v2213, %v2281
    %v2346 = vadd.f32 %v2214, %v2282
    %v2347 = vadd.f32 %v2215, %v2283
    %v2348 = vadd.f32 %v2216, %v2284
    %v2349 = vadd.f32 %v2217, %v2285
    %v2350 = vadd.f32 %v2218, %v2286
    %v2351 = vadd.f32 %v2219, %v2287
    %v2352 = vadd.f32 %v2220, %v2288
    %v2353 = vadd.f32 %v2221, %v2289
    %v2354 = vadd.f32 %v2222, %v2290
    %v2355 = vadd.f32 %v2223, %v2291
    %v2356 = vadd.f32 %v2224, %v2292
    %v2357 = vadd.f32 %v2225, %v2293
    %v2358 = vadd.f32 %v2226, %v2294
    %v2359 = vadd.f32 %v2227, %v2295
    %v2360 = vadd.f32 %v2228, %v2296
    %v2361 = vadd.f32 %v2229, %v2297
    %v2362 = vadd.f32 %v2230, %v2298
    %v2363 = vadd.f32 %v2231, %v2299
    %v2364 = vadd.f32 %v2232, %v2300
    %v2365 = vadd.f32 %v2233, %v2301
    %v2366 = vadd.f32 %v2234, %v2302
    %v2367 = vadd.f32 %v2235, %v2303
    %v2368 = vadd.f32 %v2236, %v2304
    %v2369 = vadd.f32 %v2237, %v2305
    %v2370 = vadd.f32 %v2238, %v2306
    %v2371 = vadd.f32 %v2239, %v2307
    %v2372 = vadd.f32 %v2240, %v2308
    %v2373 = vadd.f32 %v2241, %v2309
    %v2374 = vadd.f32 %v2242, %v2310
    %v2375 = vadd.f32 %v2243, %v2311
    %v2376 = vadd.f32 %v2244, %v2312
    %v2377 = vadd.f32 %v2245, %v2313
    %v2378 = vadd.f32 %v2246, %v2314
    %v2379 = vadd.f32 %v2247, %v2315
    %v2380 = vadd.f32 %v2248, %v2316
    %v2381 = vadd.f32 %v2249, %v2317
    %v2382 = vadd.f32 %v2250, %v2318
    %v2383 = vadd.f32 %v2251, %v2319
    %v2384 = vld [vmem:[#allocation8] sm:$0xff]
    %v2385 = vld [vmem:[#allocation8 + $0x8] sm:$0xff]
    %v2386 = vld [vmem:[#allocation8 + $0x10] sm:$0xff]
    %v2387 = vld [vmem:[#allocation8 + $0x18] sm:$0xff]
    %v2388 = vld [vmem:[#allocation8 + $0x20] sm:$0xff]
    %v2389 = vld [vmem:[#allocation8 + $0x28] sm:$0xff]
    %v2390 = vld [vmem:[#allocation8 + $0x30] sm:$0xff]
    %v2391 = vld [vmem:[#allocation8 + $0x38] sm:$0xff]
    %v2392 = vld [vmem:[#allocation8 + $0x40] sm:$0xff]
    %v2393 = vld [vmem:[#allocation8 + $0x48] sm:$0xff]
    %v2394 = vld [vmem:[#allocation8 + $0x50] sm:$0xff]
    %v2395 = vld [vmem:[#allocation8 + $0x58] sm:$0xff]
    %v2396 = vld [vmem:[#allocation8 + $0x60] sm:$0xff]
    %v2397 = vld [vmem:[#allocation8 + $0x68] sm:$0xff]
    %v2398 = vld [vmem:[#allocation8 + $0x70] sm:$0xff]
    %v2399 = vld [vmem:[#allocation8 + $0x78] sm:$0xff]
    %v2400 = vld [vmem:[#allocation8 + $0x80] sm:$0xff]
    %v2401 = vld [vmem:[#allocation8 + $0x88] sm:$0xff]
    %v2402 = vld [vmem:[#allocation8 + $0x90] sm:$0xff]
    %v2403 = vld [vmem:[#allocation8 + $0x98] sm:$0xff]
    %v2404 = vld [vmem:[#allocation8 + $0xa0] sm:$0xff]
    %v2405 = vld [vmem:[#allocation8 + $0xa8] sm:$0xff]
    %v2406 = vld [vmem:[#allocation8 + $0xb0] sm:$0xff]
    %v2407 = vld [vmem:[#allocation8 + $0xb8] sm:$0xff]
    %v2408 = vld [vmem:[#allocation8 + $0xc0] sm:$0xff]
    %v2409 = vld [vmem:[#allocation8 + $0xc8] sm:$0xff]
    %v2410 = vld [vmem:[#allocation8 + $0xd0] sm:$0xff]
    %v2411 = vld [vmem:[#allocation8 + $0xd8] sm:$0xff]
    %v2412 = vld [vmem:[#allocation8 + $0xe0] sm:$0xff]
    %v2413 = vld [vmem:[#allocation8 + $0xe8] sm:$0xff]
    %v2414 = vld [vmem:[#allocation8 + $0xf0] sm:$0xff]
    %v2415 = vld [vmem:[#allocation8 + $0xf8] sm:$0xff]
    %v2416 = vld [vmem:[#allocation8 + $0x100] sm:$0xff]
    %v2417 = vld [vmem:[#allocation8 + $0x108] sm:$0xff]
    %v2418 = vld [vmem:[#allocation8 + $0x110] sm:$0xff]
    %v2419 = vld [vmem:[#allocation8 + $0x118] sm:$0xff]
    %v2420 = vld [vmem:[#allocation8 + $0x120] sm:$0xff]
    %v2421 = vld [vmem:[#allocation8 + $0x128] sm:$0xff]
    %v2422 = vld [vmem:[#allocation8 + $0x130] sm:$0xff]
    %v2423 = vld [vmem:[#allocation8 + $0x138] sm:$0xff]
    %v2424 = vld [vmem:[#allocation8 + $0x140] sm:$0xff]
    %v2425 = vld [vmem:[#allocation8 + $0x148] sm:$0xff]
    %v2426 = vld [vmem:[#allocation8 + $0x150] sm:$0xff]
    %v2427 = vld [vmem:[#allocation8 + $0x158] sm:$0xff]
    %v2428 = vld [vmem:[#allocation8 + $0x160] sm:$0xff]
    %v2429 = vld [vmem:[#allocation8 + $0x168] sm:$0xff]
    %v2430 = vld [vmem:[#allocation8 + $0x170] sm:$0xff]
    %v2431 = vld [vmem:[#allocation8 + $0x178] sm:$0xff]
    %v2432 = vld [vmem:[#allocation8 + $0x180] sm:$0xff]
    %v2433 = vld [vmem:[#allocation8 + $0x188] sm:$0xff]
    %v2434 = vld [vmem:[#allocation8 + $0x190] sm:$0xff]
    %v2435 = vld [vmem:[#allocation8 + $0x198] sm:$0xff]
    %v2436 = vld [vmem:[#allocation8 + $0x1a0] sm:$0xff]
    %v2437 = vld [vmem:[#allocation8 + $0x1a8] sm:$0xff]
    %v2438 = vld [vmem:[#allocation8 + $0x1b0] sm:$0xff]
    %v2439 = vld [vmem:[#allocation8 + $0x1b8] sm:$0xff]
    %v2440 = vld [vmem:[#allocation8 + $0x1c0] sm:$0xff]
    %v2441 = vld [vmem:[#allocation8 + $0x1c8] sm:$0xff]
    %v2442 = vld [vmem:[#allocation8 + $0x1d0] sm:$0xff]
    %v2443 = vld [vmem:[#allocation8 + $0x1d8] sm:$0xff]
    %v2444 = vld [vmem:[#allocation8 + $0x1e0] sm:$0xff]
    %v2445 = vld [vmem:[#allocation8 + $0x1e8] sm:$0xff]
    %v2446 = vld [vmem:[#allocation8 + $0x1f0] sm:$0xff]
    %v2447 = vld [vmem:[#allocation8 + $0x1f8] sm:$0xff]
    %2449 = vset.pattern.permute.xlu0 0
    %2450 = vperm.xlu0 %2449, %v2384
    %v2451 = vpop.permute.xlu0 %2450
    %2454 = vset.pattern.permute.xlu0 0
    %2455 = vperm.xlu0 %2454, %v2385
    %v2456 = vpop.permute.xlu0 %2455
    %2459 = vset.pattern.permute.xlu0 0
    %2460 = vperm.xlu0 %2459, %v2386
    %v2461 = vpop.permute.xlu0 %2460
    %2464 = vset.pattern.permute.xlu0 0
    %2465 = vperm.xlu0 %2464, %v2387
    %v2466 = vpop.permute.xlu0 %2465
    %2469 = vset.pattern.permute.xlu0 0
    %2470 = vperm.xlu0 %2469, %v2388
    %v2471 = vpop.permute.xlu0 %2470
    %2474 = vset.pattern.permute.xlu0 0
    %2475 = vperm.xlu0 %2474, %v2389
    %v2476 = vpop.permute.xlu0 %2475
    %2479 = vset.pattern.permute.xlu0 0
    %2480 = vperm.xlu0 %2479, %v2390
    %v2481 = vpop.permute.xlu0 %2480
    %2484 = vset.pattern.permute.xlu0 0
    %2485 = vperm.xlu0 %2484, %v2391
    %v2486 = vpop.permute.xlu0 %2485
    %2489 = vset.pattern.permute.xlu0 0
    %2490 = vperm.xlu0 %2489, %v2392
    %v2491 = vpop.permute.xlu0 %2490
    %2494 = vset.pattern.permute.xlu0 0
    %2495 = vperm.xlu0 %2494, %v2393
    %v2496 = vpop.permute.xlu0 %2495
    %2499 = vset.pattern.permute.xlu0 0
    %2500 = vperm.xlu0 %2499, %v2394
    %v2501 = vpop.permute.xlu0 %2500
    %2504 = vset.pattern.permute.xlu0 0
    %2505 = vperm.xlu0 %2504, %v2395
    %v2506 = vpop.permute.xlu0 %2505
    %2509 = vset.pattern.permute.xlu0 0
    %2510 = vperm.xlu0 %2509, %v2396
    %v2511 = vpop.permute.xlu0 %2510
    %2514 = vset.pattern.permute.xlu0 0
    %2515 = vperm.xlu0 %2514, %v2397
    %v2516 = vpop.permute.xlu0 %2515
    %2519 = vset.pattern.permute.xlu0 0
    %2520 = vperm.xlu0 %2519, %v2398
    %v2521 = vpop.permute.xlu0 %2520
    %2524 = vset.pattern.permute.xlu0 0
    %2525 = vperm.xlu0 %2524, %v2399
    %v2526 = vpop.permute.xlu0 %2525
    %2529 = vset.pattern.permute.xlu0 0
    %2530 = vperm.xlu0 %2529, %v2400
    %v2531 = vpop.permute.xlu0 %2530
    %2534 = vset.pattern.permute.xlu0 0
    %2535 = vperm.xlu0 %2534, %v2401
    %v2536 = vpop.permute.xlu0 %2535
    %2539 = vset.pattern.permute.xlu0 0
    %2540 = vperm.xlu0 %2539, %v2402
    %v2541 = vpop.permute.xlu0 %2540
    %2544 = vset.pattern.permute.xlu0 0
    %2545 = vperm.xlu0 %2544, %v2403
    %v2546 = vpop.permute.xlu0 %2545
    %2549 = vset.pattern.permute.xlu0 0
    %2550 = vperm.xlu0 %2549, %v2404
    %v2551 = vpop.permute.xlu0 %2550
    %2554 = vset.pattern.permute.xlu0 0
    %2555 = vperm.xlu0 %2554, %v2405
    %v2556 = vpop.permute.xlu0 %2555
    %2559 = vset.pattern.permute.xlu0 0
    %2560 = vperm.xlu0 %2559, %v2406
    %v2561 = vpop.permute.xlu0 %2560
    %2564 = vset.pattern.permute.xlu0 0
    %2565 = vperm.xlu0 %2564, %v2407
    %v2566 = vpop.permute.xlu0 %2565
    %2569 = vset.pattern.permute.xlu0 0
    %2570 = vperm.xlu0 %2569, %v2408
    %v2571 = vpop.permute.xlu0 %2570
    %2574 = vset.pattern.permute.xlu0 0
    %2575 = vperm.xlu0 %2574, %v2409
    %v2576 = vpop.permute.xlu0 %2575
    %2579 = vset.pattern.permute.xlu0 0
    %2580 = vperm.xlu0 %2579, %v2410
    %v2581 = vpop.permute.xlu0 %2580
    %2584 = vset.pattern.permute.xlu0 0
    %2585 = vperm.xlu0 %2584, %v2411
    %v2586 = vpop.permute.xlu0 %2585
    %2589 = vset.pattern.permute.xlu0 0
    %2590 = vperm.xlu0 %2589, %v2412
    %v2591 = vpop.permute.xlu0 %2590
    %2594 = vset.pattern.permute.xlu0 0
    %2595 = vperm.xlu0 %2594, %v2413
    %v2596 = vpop.permute.xlu0 %2595
    %2599 = vset.pattern.permute.xlu0 0
    %2600 = vperm.xlu0 %2599, %v2414
    %v2601 = vpop.permute.xlu0 %2600
    %2604 = vset.pattern.permute.xlu0 0
    %2605 = vperm.xlu0 %2604, %v2415
    %v2606 = vpop.permute.xlu0 %2605
    %2609 = vset.pattern.permute.xlu0 0
    %2610 = vperm.xlu0 %2609, %v2416
    %v2611 = vpop.permute.xlu0 %2610
    %2614 = vset.pattern.permute.xlu0 0
    %2615 = vperm.xlu0 %2614, %v2417
    %v2616 = vpop.permute.xlu0 %2615
    %2619 = vset.pattern.permute.xlu0 0
    %2620 = vperm.xlu0 %2619, %v2418
    %v2621 = vpop.permute.xlu0 %2620
    %2624 = vset.pattern.permute.xlu0 0
    %2625 = vperm.xlu0 %2624, %v2419
    %v2626 = vpop.permute.xlu0 %2625
    %2629 = vset.pattern.permute.xlu0 0
    %2630 = vperm.xlu0 %2629, %v2420
    %v2631 = vpop.permute.xlu0 %2630
    %2634 = vset.pattern.permute.xlu0 0
    %2635 = vperm.xlu0 %2634, %v2421
    %v2636 = vpop.permute.xlu0 %2635
    %2639 = vset.pattern.permute.xlu0 0
    %2640 = vperm.xlu0 %2639, %v2422
    %v2641 = vpop.permute.xlu0 %2640
    %2644 = vset.pattern.permute.xlu0 0
    %2645 = vperm.xlu0 %2644, %v2423
    %v2646 = vpop.permute.xlu0 %2645
    %2649 = vset.pattern.permute.xlu0 0
    %2650 = vperm.xlu0 %2649, %v2424
    %v2651 = vpop.permute.xlu0 %2650
    %2654 = vset.pattern.permute.xlu0 0
    %2655 = vperm.xlu0 %2654, %v2425
    %v2656 = vpop.permute.xlu0 %2655
    %2659 = vset.pattern.permute.xlu0 0
    %2660 = vperm.xlu0 %2659, %v2426
    %v2661 = vpop.permute.xlu0 %2660
    %2664 = vset.pattern.permute.xlu0 0
    %2665 = vperm.xlu0 %2664, %v2427
    %v2666 = vpop.permute.xlu0 %2665
    %2669 = vset.pattern.permute.xlu0 0
    %2670 = vperm.xlu0 %2669, %v2428
    %v2671 = vpop.permute.xlu0 %2670
    %2674 = vset.pattern.permute.xlu0 0
    %2675 = vperm.xlu0 %2674, %v2429
    %v2676 = vpop.permute.xlu0 %2675
    %2679 = vset.pattern.permute.xlu0 0
    %2680 = vperm.xlu0 %2679, %v2430
    %v2681 = vpop.permute.xlu0 %2680
    %2684 = vset.pattern.permute.xlu0 0
    %2685 = vperm.xlu0 %2684, %v2431
    %v2686 = vpop.permute.xlu0 %2685
    %2689 = vset.pattern.permute.xlu0 0
    %2690 = vperm.xlu0 %2689, %v2432
    %v2691 = vpop.permute.xlu0 %2690
    %2694 = vset.pattern.permute.xlu0 0
    %2695 = vperm.xlu0 %2694, %v2433
    %v2696 = vpop.permute.xlu0 %2695
    %2699 = vset.pattern.permute.xlu0 0
    %2700 = vperm.xlu0 %2699, %v2434
    %v2701 = vpop.permute.xlu0 %2700
    %2704 = vset.pattern.permute.xlu0 0
    %2705 = vperm.xlu0 %2704, %v2435
    %v2706 = vpop.permute.xlu0 %2705
    %2709 = vset.pattern.permute.xlu0 0
    %2710 = vperm.xlu0 %2709, %v2436
    %v2711 = vpop.permute.xlu0 %2710
    %2714 = vset.pattern.permute.xlu0 0
    %2715 = vperm.xlu0 %2714, %v2437
    %v2716 = vpop.permute.xlu0 %2715
    %2719 = vset.pattern.permute.xlu0 0
    %2720 = vperm.xlu0 %2719, %v2438
    %v2721 = vpop.permute.xlu0 %2720
    %2724 = vset.pattern.permute.xlu0 0
    %2725 = vperm.xlu0 %2724, %v2439
    %v2726 = vpop.permute.xlu0 %2725
    %2729 = vset.pattern.permute.xlu0 0
    %2730 = vperm.xlu0 %2729, %v2440
    %v2731 = vpop.permute.xlu0 %2730
    %2734 = vset.pattern.permute.xlu0 0
    %2735 = vperm.xlu0 %2734, %v2441
    %v2736 = vpop.permute.xlu0 %2735
    %2739 = vset.pattern.permute.xlu0 0
    %2740 = vperm.xlu0 %2739, %v2442
    %v2741 = vpop.permute.xlu0 %2740
    %2744 = vset.pattern.permute.xlu0 0
    %2745 = vperm.xlu0 %2744, %v2443
    %v2746 = vpop.permute.xlu0 %2745
    %2749 = vset.pattern.permute.xlu0 0
    %2750 = vperm.xlu0 %2749, %v2444
    %v2751 = vpop.permute.xlu0 %2750
    %2754 = vset.pattern.permute.xlu0 0
    %2755 = vperm.xlu0 %2754, %v2445
    %v2756 = vpop.permute.xlu0 %2755
    %2759 = vset.pattern.permute.xlu0 0
    %2760 = vperm.xlu0 %2759, %v2446
    %v2761 = vpop.permute.xlu0 %2760
    %2764 = vset.pattern.permute.xlu0 0
    %2765 = vperm.xlu0 %2764, %v2447
    %v2766 = vpop.permute.xlu0 %2765
    %v2768 = vmul.f32 %v1648, %v2451
    %v2769 = vmul.f32 %v1649, %v2456
    %v2770 = vmul.f32 %v1586, %v2461
    %v2771 = vmul.f32 %v1587, %v2466
    %v2772 = vmul.f32 %v1588, %v2471
    %v2773 = vmul.f32 %v1589, %v2476
    %v2774 = vmul.f32 %v1590, %v2481
    %v2775 = vmul.f32 %v1591, %v2486
    %v2776 = vmul.f32 %v1592, %v2491
    %v2777 = vmul.f32 %v1593, %v2496
    %v2778 = vmul.f32 %v1594, %v2501
    %v2779 = vmul.f32 %v1595, %v2506
    %v2780 = vmul.f32 %v1596, %v2511
    %v2781 = vmul.f32 %v1597, %v2516
    %v2782 = vmul.f32 %v1598, %v2521
    %v2783 = vmul.f32 %v1599, %v2526
    %v2784 = vmul.f32 %v1600, %v2531
    %v2785 = vmul.f32 %v1601, %v2536
    %v2786 = vmul.f32 %v1602, %v2541
    %v2787 = vmul.f32 %v1603, %v2546
    %v2788 = vmul.f32 %v1604, %v2551
    %v2789 = vmul.f32 %v1605, %v2556
    %v2790 = vmul.f32 %v1606, %v2561
    %v2791 = vmul.f32 %v1607, %v2566
    %v2792 = vmul.f32 %v1608, %v2571
    %v2793 = vmul.f32 %v1609, %v2576
    %v2794 = vmul.f32 %v1610, %v2581
    %v2795 = vmul.f32 %v1611, %v2586
    %v2796 = vmul.f32 %v1612, %v2591
    %v2797 = vmul.f32 %v1613, %v2596
    %v2798 = vmul.f32 %v1614, %v2601
    %v2799 = vmul.f32 %v1615, %v2606
    %v2800 = vmul.f32 %v1616, %v2611
    %v2801 = vmul.f32 %v1617, %v2616
    %v2802 = vmul.f32 %v1618, %v2621
    %v2803 = vmul.f32 %v1619, %v2626
    %v2804 = vmul.f32 %v1620, %v2631
    %v2805 = vmul.f32 %v1621, %v2636
    %v2806 = vmul.f32 %v1622, %v2641
    %v2807 = vmul.f32 %v1623, %v2646
    %v2808 = vmul.f32 %v1624, %v2651
    %v2809 = vmul.f32 %v1625, %v2656
    %v2810 = vmul.f32 %v1626, %v2661
    %v2811 = vmul.f32 %v1627, %v2666
    %v2812 = vmul.f32 %v1628, %v2671
    %v2813 = vmul.f32 %v1629, %v2676
    %v2814 = vmul.f32 %v1630, %v2681
    %v2815 = vmul.f32 %v1631, %v2686
    %v2816 = vmul.f32 %v1632, %v2691
    %v2817 = vmul.f32 %v1633, %v2696
    %v2818 = vmul.f32 %v1634, %v2701
    %v2819 = vmul.f32 %v1635, %v2706
    %v2820 = vmul.f32 %v1636, %v2711
    %v2821 = vmul.f32 %v1637, %v2716
    %v2822 = vmul.f32 %v1638, %v2721
    %v2823 = vmul.f32 %v1639, %v2726
    %v2824 = vmul.f32 %v1640, %v2731
    %v2825 = vmul.f32 %v1641, %v2736
    %v2826 = vmul.f32 %v1642, %v2741
    %v2827 = vmul.f32 %v1643, %v2746
    %v2828 = vmul.f32 %v1644, %v2751
    %v2829 = vmul.f32 %v1645, %v2756
    %v2830 = vmul.f32 %v1646, %v2761
    %v2831 = vmul.f32 %v1647, %v2766
    %v2832 = vadd.f32 %v2768, %v1988
    %v2833 = vadd.f32 %v2769, %v1989
    %v2834 = vadd.f32 %v2770, %v1990
    %v2835 = vadd.f32 %v2771, %v1991
    %v2836 = vadd.f32 %v2772, %v1992
    %v2837 = vadd.f32 %v2773, %v1993
    %v2838 = vadd.f32 %v2774, %v1994
    %v2839 = vadd.f32 %v2775, %v1995
    %v2840 = vadd.f32 %v2776, %v1996
    %v2841 = vadd.f32 %v2777, %v1997
    %v2842 = vadd.f32 %v2778, %v1998
    %v2843 = vadd.f32 %v2779, %v1999
    %v2844 = vadd.f32 %v2780, %v2000
    %v2845 = vadd.f32 %v2781, %v2001
    %v2846 = vadd.f32 %v2782, %v2002
    %v2847 = vadd.f32 %v2783, %v2003
    %v2848 = vadd.f32 %v2784, %v2004
    %v2849 = vadd.f32 %v2785, %v2005
    %v2850 = vadd.f32 %v2786, %v2006
    %v2851 = vadd.f32 %v2787, %v2007
    %v2852 = vadd.f32 %v2788, %v2008
    %v2853 = vadd.f32 %v2789, %v2009
    %v2854 = vadd.f32 %v2790, %v2010
    %v2855 = vadd.f32 %v2791, %v2011
    %v2856 = vadd.f32 %v2792, %v2012
    %v2857 = vadd.f32 %v2793, %v2013
    %v2858 = vadd.f32 %v2794, %v2014
    %v2859 = vadd.f32 %v2795, %v2015
    %v2860 = vadd.f32 %v2796, %v2016
    %v2861 = vadd.f32 %v2797, %v2017
    %v2862 = vadd.f32 %v2798, %v2018
    %v2863 = vadd.f32 %v2799, %v2019
    %v2864 = vadd.f32 %v2800, %v2020
    %v2865 = vadd.f32 %v2801, %v2021
    %v2866 = vadd.f32 %v2802, %v2022
    %v2867 = vadd.f32 %v2803, %v2023
    %v2868 = vadd.f32 %v2804, %v2024
    %v2869 = vadd.f32 %v2805, %v2025
    %v2870 = vadd.f32 %v2806, %v2026
    %v2871 = vadd.f32 %v2807, %v2027
    %v2872 = vadd.f32 %v2808, %v2028
    %v2873 = vadd.f32 %v2809, %v2029
    %v2874 = vadd.f32 %v2810, %v2030
    %v2875 = vadd.f32 %v2811, %v2031
    %v2876 = vadd.f32 %v2812, %v2032
    %v2877 = vadd.f32 %v2813, %v2033
    %v2878 = vadd.f32 %v2814, %v2034
    %v2879 = vadd.f32 %v2815, %v2035
    %v2880 = vadd.f32 %v2816, %v2036
    %v2881 = vadd.f32 %v2817, %v2037
    %v2882 = vadd.f32 %v2818, %v2038
    %v2883 = vadd.f32 %v2819, %v2039
    %v2884 = vadd.f32 %v2820, %v2040
    %v2885 = vadd.f32 %v2821, %v2041
    %v2886 = vadd.f32 %v2822, %v2042
    %v2887 = vadd.f32 %v2823, %v2043
    %v2888 = vadd.f32 %v2824, %v2044
    %v2889 = vadd.f32 %v2825, %v2045
    %v2890 = vadd.f32 %v2826, %v2046
    %v2891 = vadd.f32 %v2827, %v2047
    %v2892 = vadd.f32 %v2828, %v2048
    %v2893 = vadd.f32 %v2829, %v2049
    %v2894 = vadd.f32 %v2830, %v2050
    %v2895 = vadd.f32 %v2831, %v2051
    %v2896 = vld [vmem:[#allocation10] sm:$0xff]
    %v2897 = vld [vmem:[#allocation10 + $0x8] sm:$0xff]
    %v2898 = vld [vmem:[#allocation10 + $0x10] sm:$0xff]
    %v2899 = vld [vmem:[#allocation10 + $0x18] sm:$0xff]
    %v2900 = vld [vmem:[#allocation10 + $0x20] sm:$0xff]
    %v2901 = vld [vmem:[#allocation10 + $0x28] sm:$0xff]
    %v2902 = vld [vmem:[#allocation10 + $0x30] sm:$0xff]
    %v2903 = vld [vmem:[#allocation10 + $0x38] sm:$0xff]
    %v2904 = vld [vmem:[#allocation10 + $0x40] sm:$0xff]
    %v2905 = vld [vmem:[#allocation10 + $0x48] sm:$0xff]
    %v2906 = vld [vmem:[#allocation10 + $0x50] sm:$0xff]
    %v2907 = vld [vmem:[#allocation10 + $0x58] sm:$0xff]
    %v2908 = vld [vmem:[#allocation10 + $0x60] sm:$0xff]
    %v2909 = vld [vmem:[#allocation10 + $0x68] sm:$0xff]
    %v2910 = vld [vmem:[#allocation10 + $0x70] sm:$0xff]
    %v2911 = vld [vmem:[#allocation10 + $0x78] sm:$0xff]
    %v2912 = vld [vmem:[#allocation10 + $0x80] sm:$0xff]
    %v2913 = vld [vmem:[#allocation10 + $0x88] sm:$0xff]
    %v2914 = vld [vmem:[#allocation10 + $0x90] sm:$0xff]
    %v2915 = vld [vmem:[#allocation10 + $0x98] sm:$0xff]
    %v2916 = vld [vmem:[#allocation10 + $0xa0] sm:$0xff]
    %v2917 = vld [vmem:[#allocation10 + $0xa8] sm:$0xff]
    %v2918 = vld [vmem:[#allocation10 + $0xb0] sm:$0xff]
    %v2919 = vld [vmem:[#allocation10 + $0xb8] sm:$0xff]
    %v2920 = vld [vmem:[#allocation10 + $0xc0] sm:$0xff]
    %v2921 = vld [vmem:[#allocation10 + $0xc8] sm:$0xff]
    %v2922 = vld [vmem:[#allocation10 + $0xd0] sm:$0xff]
    %v2923 = vld [vmem:[#allocation10 + $0xd8] sm:$0xff]
    %v2924 = vld [vmem:[#allocation10 + $0xe0] sm:$0xff]
    %v2925 = vld [vmem:[#allocation10 + $0xe8] sm:$0xff]
    %v2926 = vld [vmem:[#allocation10 + $0xf0] sm:$0xff]
    %v2927 = vld [vmem:[#allocation10 + $0xf8] sm:$0xff]
    %v2928 = vld [vmem:[#allocation10 + $0x100] sm:$0xff]
    %v2929 = vld [vmem:[#allocation10 + $0x108] sm:$0xff]
    %v2930 = vld [vmem:[#allocation10 + $0x110] sm:$0xff]
    %v2931 = vld [vmem:[#allocation10 + $0x118] sm:$0xff]
    %v2932 = vld [vmem:[#allocation10 + $0x120] sm:$0xff]
    %v2933 = vld [vmem:[#allocation10 + $0x128] sm:$0xff]
    %v2934 = vld [vmem:[#allocation10 + $0x130] sm:$0xff]
    %v2935 = vld [vmem:[#allocation10 + $0x138] sm:$0xff]
    %v2936 = vld [vmem:[#allocation10 + $0x140] sm:$0xff]
    %v2937 = vld [vmem:[#allocation10 + $0x148] sm:$0xff]
    %v2938 = vld [vmem:[#allocation10 + $0x150] sm:$0xff]
    %v2939 = vld [vmem:[#allocation10 + $0x158] sm:$0xff]
    %v2940 = vld [vmem:[#allocation10 + $0x160] sm:$0xff]
    %v2941 = vld [vmem:[#allocation10 + $0x168] sm:$0xff]
    %v2942 = vld [vmem:[#allocation10 + $0x170] sm:$0xff]
    %v2943 = vld [vmem:[#allocation10 + $0x178] sm:$0xff]
    %v2944 = vld [vmem:[#allocation10 + $0x180] sm:$0xff]
    %v2945 = vld [vmem:[#allocation10 + $0x188] sm:$0xff]
    %v2946 = vld [vmem:[#allocation10 + $0x190] sm:$0xff]
    %v2947 = vld [vmem:[#allocation10 + $0x198] sm:$0xff]
    %v2948 = vld [vmem:[#allocation10 + $0x1a0] sm:$0xff]
    %v2949 = vld [vmem:[#allocation10 + $0x1a8] sm:$0xff]
    %v2950 = vld [vmem:[#allocation10 + $0x1b0] sm:$0xff]
    %v2951 = vld [vmem:[#allocation10 + $0x1b8] sm:$0xff]
    %v2952 = vld [vmem:[#allocation10 + $0x1c0] sm:$0xff]
    %v2953 = vld [vmem:[#allocation10 + $0x1c8] sm:$0xff]
    %v2954 = vld [vmem:[#allocation10 + $0x1d0] sm:$0xff]
    %v2955 = vld [vmem:[#allocation10 + $0x1d8] sm:$0xff]
    %v2956 = vld [vmem:[#allocation10 + $0x1e0] sm:$0xff]
    %v2957 = vld [vmem:[#allocation10 + $0x1e8] sm:$0xff]
    %v2958 = vld [vmem:[#allocation10 + $0x1f0] sm:$0xff]
    %v2959 = vld [vmem:[#allocation10 + $0x1f8] sm:$0xff]
    %2961 = vset.pattern.permute.xlu0 0
    %2962 = vperm.xlu0 %2961, %v2896
    %v2963 = vpop.permute.xlu0 %2962
    %2966 = vset.pattern.permute.xlu0 0
    %2967 = vperm.xlu0 %2966, %v2897
    %v2968 = vpop.permute.xlu0 %2967
    %2971 = vset.pattern.permute.xlu0 0
    %2972 = vperm.xlu0 %2971, %v2898
    %v2973 = vpop.permute.xlu0 %2972
    %2976 = vset.pattern.permute.xlu0 0
    %2977 = vperm.xlu0 %2976, %v2899
    %v2978 = vpop.permute.xlu0 %2977
    %2981 = vset.pattern.permute.xlu0 0
    %2982 = vperm.xlu0 %2981, %v2900
    %v2983 = vpop.permute.xlu0 %2982
    %2986 = vset.pattern.permute.xlu0 0
    %2987 = vperm.xlu0 %2986, %v2901
    %v2988 = vpop.permute.xlu0 %2987
    %2991 = vset.pattern.permute.xlu0 0
    %2992 = vperm.xlu0 %2991, %v2902
    %v2993 = vpop.permute.xlu0 %2992
    %2996 = vset.pattern.permute.xlu0 0
    %2997 = vperm.xlu0 %2996, %v2903
    %v2998 = vpop.permute.xlu0 %2997
    %3001 = vset.pattern.permute.xlu0 0
    %3002 = vperm.xlu0 %3001, %v2904
    %v3003 = vpop.permute.xlu0 %3002
    %3006 = vset.pattern.permute.xlu0 0
    %3007 = vperm.xlu0 %3006, %v2905
    %v3008 = vpop.permute.xlu0 %3007
    %3011 = vset.pattern.permute.xlu0 0
    %3012 = vperm.xlu0 %3011, %v2906
    %v3013 = vpop.permute.xlu0 %3012
    %3016 = vset.pattern.permute.xlu0 0
    %3017 = vperm.xlu0 %3016, %v2907
    %v3018 = vpop.permute.xlu0 %3017
    %3021 = vset.pattern.permute.xlu0 0
    %3022 = vperm.xlu0 %3021, %v2908
    %v3023 = vpop.permute.xlu0 %3022
    %3026 = vset.pattern.permute.xlu0 0
    %3027 = vperm.xlu0 %3026, %v2909
    %v3028 = vpop.permute.xlu0 %3027
    %3031 = vset.pattern.permute.xlu0 0
    %3032 = vperm.xlu0 %3031, %v2910
    %v3033 = vpop.permute.xlu0 %3032
    %3036 = vset.pattern.permute.xlu0 0
    %3037 = vperm.xlu0 %3036, %v2911
    %v3038 = vpop.permute.xlu0 %3037
    %3041 = vset.pattern.permute.xlu0 0
    %3042 = vperm.xlu0 %3041, %v2912
    %v3043 = vpop.permute.xlu0 %3042
    %3046 = vset.pattern.permute.xlu0 0
    %3047 = vperm.xlu0 %3046, %v2913
    %v3048 = vpop.permute.xlu0 %3047
    %3051 = vset.pattern.permute.xlu0 0
    %3052 = vperm.xlu0 %3051, %v2914
    %v3053 = vpop.permute.xlu0 %3052
    %3056 = vset.pattern.permute.xlu0 0
    %3057 = vperm.xlu0 %3056, %v2915
    %v3058 = vpop.permute.xlu0 %3057
    %3061 = vset.pattern.permute.xlu0 0
    %3062 = vperm.xlu0 %3061, %v2916
    %v3063 = vpop.permute.xlu0 %3062
    %3066 = vset.pattern.permute.xlu0 0
    %3067 = vperm.xlu0 %3066, %v2917
    %v3068 = vpop.permute.xlu0 %3067
    %3071 = vset.pattern.permute.xlu0 0
    %3072 = vperm.xlu0 %3071, %v2918
    %v3073 = vpop.permute.xlu0 %3072
    %3076 = vset.pattern.permute.xlu0 0
    %3077 = vperm.xlu0 %3076, %v2919
    %v3078 = vpop.permute.xlu0 %3077
    %3081 = vset.pattern.permute.xlu0 0
    %3082 = vperm.xlu0 %3081, %v2920
    %v3083 = vpop.permute.xlu0 %3082
    %3086 = vset.pattern.permute.xlu0 0
    %3087 = vperm.xlu0 %3086, %v2921
    %v3088 = vpop.permute.xlu0 %3087
    %3091 = vset.pattern.permute.xlu0 0
    %3092 = vperm.xlu0 %3091, %v2922
    %v3093 = vpop.permute.xlu0 %3092
    %3096 = vset.pattern.permute.xlu0 0
    %3097 = vperm.xlu0 %3096, %v2923
    %v3098 = vpop.permute.xlu0 %3097
    %3101 = vset.pattern.permute.xlu0 0
    %3102 = vperm.xlu0 %3101, %v2924
    %v3103 = vpop.permute.xlu0 %3102
    %3106 = vset.pattern.permute.xlu0 0
    %3107 = vperm.xlu0 %3106, %v2925
    %v3108 = vpop.permute.xlu0 %3107
    %3111 = vset.pattern.permute.xlu0 0
    %3112 = vperm.xlu0 %3111, %v2926
    %v3113 = vpop.permute.xlu0 %3112
    %3116 = vset.pattern.permute.xlu0 0
    %3117 = vperm.xlu0 %3116, %v2927
    %v3118 = vpop.permute.xlu0 %3117
    %3121 = vset.pattern.permute.xlu0 0
    %3122 = vperm.xlu0 %3121, %v2928
    %v3123 = vpop.permute.xlu0 %3122
    %3126 = vset.pattern.permute.xlu0 0
    %3127 = vperm.xlu0 %3126, %v2929
    %v3128 = vpop.permute.xlu0 %3127
    %3131 = vset.pattern.permute.xlu0 0
    %3132 = vperm.xlu0 %3131, %v2930
    %v3133 = vpop.permute.xlu0 %3132
    %3136 = vset.pattern.permute.xlu0 0
    %3137 = vperm.xlu0 %3136, %v2931
    %v3138 = vpop.permute.xlu0 %3137
    %3141 = vset.pattern.permute.xlu0 0
    %3142 = vperm.xlu0 %3141, %v2932
    %v3143 = vpop.permute.xlu0 %3142
    %3146 = vset.pattern.permute.xlu0 0
    %3147 = vperm.xlu0 %3146, %v2933
    %v3148 = vpop.permute.xlu0 %3147
    %3151 = vset.pattern.permute.xlu0 0
    %3152 = vperm.xlu0 %3151, %v2934
    %v3153 = vpop.permute.xlu0 %3152
    %3156 = vset.pattern.permute.xlu0 0
    %3157 = vperm.xlu0 %3156, %v2935
    %v3158 = vpop.permute.xlu0 %3157
    %3161 = vset.pattern.permute.xlu0 0
    %3162 = vperm.xlu0 %3161, %v2936
    %v3163 = vpop.permute.xlu0 %3162
    %3166 = vset.pattern.permute.xlu0 0
    %3167 = vperm.xlu0 %3166, %v2937
    %v3168 = vpop.permute.xlu0 %3167
    %3171 = vset.pattern.permute.xlu0 0
    %3172 = vperm.xlu0 %3171, %v2938
    %v3173 = vpop.permute.xlu0 %3172
    %3176 = vset.pattern.permute.xlu0 0
    %3177 = vperm.xlu0 %3176, %v2939
    %v3178 = vpop.permute.xlu0 %3177
    %3181 = vset.pattern.permute.xlu0 0
    %3182 = vperm.xlu0 %3181, %v2940
    %v3183 = vpop.permute.xlu0 %3182
    %3186 = vset.pattern.permute.xlu0 0
    %3187 = vperm.xlu0 %3186, %v2941
    %v3188 = vpop.permute.xlu0 %3187
    %3191 = vset.pattern.permute.xlu0 0
    %3192 = vperm.xlu0 %3191, %v2942
    %v3193 = vpop.permute.xlu0 %3192
    %3196 = vset.pattern.permute.xlu0 0
    %3197 = vperm.xlu0 %3196, %v2943
    %v3198 = vpop.permute.xlu0 %3197
    %3201 = vset.pattern.permute.xlu0 0
    %3202 = vperm.xlu0 %3201, %v2944
    %v3203 = vpop.permute.xlu0 %3202
    %3206 = vset.pattern.permute.xlu0 0
    %3207 = vperm.xlu0 %3206, %v2945
    %v3208 = vpop.permute.xlu0 %3207
    %3211 = vset.pattern.permute.xlu0 0
    %3212 = vperm.xlu0 %3211, %v2946
    %v3213 = vpop.permute.xlu0 %3212
    %3216 = vset.pattern.permute.xlu0 0
    %3217 = vperm.xlu0 %3216, %v2947
    %v3218 = vpop.permute.xlu0 %3217
    %3221 = vset.pattern.permute.xlu0 0
    %3222 = vperm.xlu0 %3221, %v2948
    %v3223 = vpop.permute.xlu0 %3222
    %3226 = vset.pattern.permute.xlu0 0
    %3227 = vperm.xlu0 %3226, %v2949
    %v3228 = vpop.permute.xlu0 %3227
    %3231 = vset.pattern.permute.xlu0 0
    %3232 = vperm.xlu0 %3231, %v2950
    %v3233 = vpop.permute.xlu0 %3232
    %3236 = vset.pattern.permute.xlu0 0
    %3237 = vperm.xlu0 %3236, %v2951
    %v3238 = vpop.permute.xlu0 %3237
    %3241 = vset.pattern.permute.xlu0 0
    %3242 = vperm.xlu0 %3241, %v2952
    %v3243 = vpop.permute.xlu0 %3242
    %3246 = vset.pattern.permute.xlu0 0
    %3247 = vperm.xlu0 %3246, %v2953
    %v3248 = vpop.permute.xlu0 %3247
    %3251 = vset.pattern.permute.xlu0 0
    %3252 = vperm.xlu0 %3251, %v2954
    %v3253 = vpop.permute.xlu0 %3252
    %3256 = vset.pattern.permute.xlu0 0
    %3257 = vperm.xlu0 %3256, %v2955
    %v3258 = vpop.permute.xlu0 %3257
    %3261 = vset.pattern.permute.xlu0 0
    %3262 = vperm.xlu0 %3261, %v2956
    %v3263 = vpop.permute.xlu0 %3262
    %3266 = vset.pattern.permute.xlu0 0
    %3267 = vperm.xlu0 %3266, %v2957
    %v3268 = vpop.permute.xlu0 %3267
    %3271 = vset.pattern.permute.xlu0 0
    %3272 = vperm.xlu0 %3271, %v2958
    %v3273 = vpop.permute.xlu0 %3272
    %3276 = vset.pattern.permute.xlu0 0
    %3277 = vperm.xlu0 %3276, %v2959
    %v3278 = vpop.permute.xlu0 %3277
    %v3280 = vmul.f32 %v2322, %v2963
    %v3281 = vmul.f32 %v2323, %v2968
    %v3282 = vmul.f32 %v2324, %v2973
    %v3283 = vmul.f32 %v2325, %v2978
    %v3284 = vmul.f32 %v2326, %v2983
    %v3285 = vmul.f32 %v2327, %v2988
    %v3286 = vmul.f32 %v2328, %v2993
    %v3287 = vmul.f32 %v2329, %v2998
    %v3288 = vmul.f32 %v2330, %v3003
    %v3289 = vmul.f32 %v2331, %v3008
    %v3290 = vmul.f32 %v2332, %v3013
    %v3291 = vmul.f32 %v2333, %v3018
    %v3292 = vmul.f32 %v2334, %v3023
    %v3293 = vmul.f32 %v2335, %v3028
    %v3294 = vmul.f32 %v2336, %v3033
    %v3295 = vmul.f32 %v2337, %v3038
    %v3296 = vmul.f32 %v2338, %v3043
    %v3297 = vmul.f32 %v2339, %v3048
    %v3298 = vmul.f32 %v2340, %v3053
    %v3299 = vmul.f32 %v2341, %v3058
    %v3300 = vmul.f32 %v2342, %v3063
    %v3301 = vmul.f32 %v2343, %v3068
    %v3302 = vmul.f32 %v2344, %v3073
    %v3303 = vmul.f32 %v2345, %v3078
    %v3304 = vmul.f32 %v2346, %v3083
    %v3305 = vmul.f32 %v2347, %v3088
    %v3306 = vmul.f32 %v2348, %v3093
    %v3307 = vmul.f32 %v2349, %v3098
    %v3308 = vmul.f32 %v2350, %v3103
    %v3309 = vmul.f32 %v2351, %v3108
    %v3310 = vmul.f32 %v2352, %v3113
    %v3311 = vmul.f32 %v2353, %v3118
    %v3312 = vmul.f32 %v2354, %v3123
    %v3313 = vmul.f32 %v2355, %v3128
    %v3314 = vmul.f32 %v2356, %v3133
    %v3315 = vmul.f32 %v2357, %v3138
    %v3316 = vmul.f32 %v2358, %v3143
    %v3317 = vmul.f32 %v2359, %v3148
    %v3318 = vmul.f32 %v2360, %v3153
    %v3319 = vmul.f32 %v2361, %v3158
    %v3320 = vmul.f32 %v2362, %v3163
    %v3321 = vmul.f32 %v2363, %v3168
    %v3322 = vmul.f32 %v2364, %v3173
    %v3323 = vmul.f32 %v2365, %v3178
    %v3324 = vmul.f32 %v2366, %v3183
    %v3325 = vmul.f32 %v2367, %v3188
    %v3326 = vmul.f32 %v2368, %v3193
    %v3327 = vmul.f32 %v2369, %v3198
    %v3328 = vmul.f32 %v2370, %v3203
    %v3329 = vmul.f32 %v2371, %v3208
    %v3330 = vmul.f32 %v2372, %v3213
    %v3331 = vmul.f32 %v2373, %v3218
    %v3332 = vmul.f32 %v2374, %v3223
    %v3333 = vmul.f32 %v2375, %v3228
    %v3334 = vmul.f32 %v2376, %v3233
    %v3335 = vmul.f32 %v2377, %v3238
    %v3336 = vmul.f32 %v2378, %v3243
    %v3337 = vmul.f32 %v2379, %v3248
    %v3338 = vmul.f32 %v2380, %v3253
    %v3339 = vmul.f32 %v2381, %v3258
    %v3340 = vmul.f32 %v2382, %v3263
    %v3341 = vmul.f32 %v2383, %v3268
    %v3342 = vmul.f32 %v2320, %v3273
    %v3343 = vmul.f32 %v2321, %v3278
    %v3344 = vadd.f32 %v2832, %v3280
    %v3345 = vadd.f32 %v2833, %v3281
    %v3346 = vadd.f32 %v2834, %v3282
    %v3347 = vadd.f32 %v2835, %v3283
    %v3348 = vadd.f32 %v2836, %v3284
    %v3349 = vadd.f32 %v2837, %v3285
    %v3350 = vadd.f32 %v2838, %v3286
    %v3351 = vadd.f32 %v2839, %v3287
    %v3352 = vadd.f32 %v2840, %v3288
    %v3353 = vadd.f32 %v2841, %v3289
    %v3354 = vadd.f32 %v2842, %v3290
    %v3355 = vadd.f32 %v2843, %v3291
    %v3356 = vadd.f32 %v2844, %v3292
    %v3357 = vadd.f32 %v2845, %v3293
    %v3358 = vadd.f32 %v2846, %v3294
    %v3359 = vadd.f32 %v2847, %v3295
    %v3360 = vadd.f32 %v2848, %v3296
    %v3361 = vadd.f32 %v2849, %v3297
    %v3362 = vadd.f32 %v2850, %v3298
    %v3363 = vadd.f32 %v2851, %v3299
    %v3364 = vadd.f32 %v2852, %v3300
    %v3365 = vadd.f32 %v2853, %v3301
    %v3366 = vadd.f32 %v2854, %v3302
    %v3367 = vadd.f32 %v2855, %v3303
    %v3368 = vadd.f32 %v2856, %v3304
    %v3369 = vadd.f32 %v2857, %v3305
    %v3370 = vadd.f32 %v2858, %v3306
    %v3371 = vadd.f32 %v2859, %v3307
    %v3372 = vadd.f32 %v2860, %v3308
    %v3373 = vadd.f32 %v2861, %v3309
    %v3374 = vadd.f32 %v2862, %v3310
    %v3375 = vadd.f32 %v2863, %v3311
    %v3376 = vadd.f32 %v2864, %v3312
    %v3377 = vadd.f32 %v2865, %v3313
    %v3378 = vadd.f32 %v2866, %v3314
    %v3379 = vadd.f32 %v2867, %v3315
    %v3380 = vadd.f32 %v2868, %v3316
    %v3381 = vadd.f32 %v2869, %v3317
    %v3382 = vadd.f32 %v2870, %v3318
    %v3383 = vadd.f32 %v2871, %v3319
    %v3384 = vadd.f32 %v2872, %v3320
    %v3385 = vadd.f32 %v2873, %v3321
    %v3386 = vadd.f32 %v2874, %v3322
    %v3387 = vadd.f32 %v2875, %v3323
    %v3388 = vadd.f32 %v2876, %v3324
    %v3389 = vadd.f32 %v2877, %v3325
    %v3390 = vadd.f32 %v2878, %v3326
    %v3391 = vadd.f32 %v2879, %v3327
    %v3392 = vadd.f32 %v2880, %v3328
    %v3393 = vadd.f32 %v2881, %v3329
    %v3394 = vadd.f32 %v2882, %v3330
    %v3395 = vadd.f32 %v2883, %v3331
    %v3396 = vadd.f32 %v2884, %v3332
    %v3397 = vadd.f32 %v2885, %v3333
    %v3398 = vadd.f32 %v2886, %v3334
    %v3399 = vadd.f32 %v2887, %v3335
    %v3400 = vadd.f32 %v2888, %v3336
    %v3401 = vadd.f32 %v2889, %v3337
    %v3402 = vadd.f32 %v2890, %v3338
    %v3403 = vadd.f32 %v2891, %v3339
    %v3404 = vadd.f32 %v2892, %v3340
    %v3405 = vadd.f32 %v2893, %v3341
    %v3406 = vadd.f32 %v2894, %v3342
    %v3407 = vadd.f32 %v2895, %v3343
    %3408 = vst [vmem:[#allocation11] sm:$0xff] %v3344
    %3409 = vst [vmem:[#allocation11 + $0x8] sm:$0xff] %v3345
    %3410 = vst [vmem:[#allocation11 + $0x10] sm:$0xff] %v3346
    %3411 = vst [vmem:[#allocation11 + $0x18] sm:$0xff] %v3347
    %3412 = vst [vmem:[#allocation11 + $0x20] sm:$0xff] %v3348
    %3413 = vst [vmem:[#allocation11 + $0x28] sm:$0xff] %v3349
    %3414 = vst [vmem:[#allocation11 + $0x30] sm:$0xff] %v3350
    %3415 = vst [vmem:[#allocation11 + $0x38] sm:$0xff] %v3351
    %3416 = vst [vmem:[#allocation11 + $0x40] sm:$0xff] %v3352
    %3417 = vst [vmem:[#allocation11 + $0x48] sm:$0xff] %v3353
    %3418 = vst [vmem:[#allocation11 + $0x50] sm:$0xff] %v3354
    %3419 = vst [vmem:[#allocation11 + $0x58] sm:$0xff] %v3355
    %3420 = vst [vmem:[#allocation11 + $0x60] sm:$0xff] %v3356
    %3421 = vst [vmem:[#allocation11 + $0x68] sm:$0xff] %v3357
    %3422 = vst [vmem:[#allocation11 + $0x70] sm:$0xff] %v3358
    %3423 = vst [vmem:[#allocation11 + $0x78] sm:$0xff] %v3359
    %3424 = vst [vmem:[#allocation11 + $0x80] sm:$0xff] %v3360
    %3425 = vst [vmem:[#allocation11 + $0x88] sm:$0xff] %v3361
    %3426 = vst [vmem:[#allocation11 + $0x90] sm:$0xff] %v3362
    %3427 = vst [vmem:[#allocation11 + $0x98] sm:$0xff] %v3363
    %3428 = vst [vmem:[#allocation11 + $0xa0] sm:$0xff] %v3364
    %3429 = vst [vmem:[#allocation11 + $0xa8] sm:$0xff] %v3365
    %3430 = vst [vmem:[#allocation11 + $0xb0] sm:$0xff] %v3366
    %3431 = vst [vmem:[#allocation11 + $0xb8] sm:$0xff] %v3367
    %3432 = vst [vmem:[#allocation11 + $0xc0] sm:$0xff] %v3368
    %3433 = vst [vmem:[#allocation11 + $0xc8] sm:$0xff] %v3369
    %3434 = vst [vmem:[#allocation11 + $0xd0] sm:$0xff] %v3370
    %3435 = vst [vmem:[#allocation11 + $0xd8] sm:$0xff] %v3371
    %3436 = vst [vmem:[#allocation11 + $0xe0] sm:$0xff] %v3372
    %3437 = vst [vmem:[#allocation11 + $0xe8] sm:$0xff] %v3373
    %3438 = vst [vmem:[#allocation11 + $0xf0] sm:$0xff] %v3374
    %3439 = vst [vmem:[#allocation11 + $0xf8] sm:$0xff] %v3375
    %3440 = vst [vmem:[#allocation11 + $0x100] sm:$0xff] %v3376
    %3441 = vst [vmem:[#allocation11 + $0x108] sm:$0xff] %v3377
    %3442 = vst [vmem:[#allocation11 + $0x110] sm:$0xff] %v3378
    %3443 = vst [vmem:[#allocation11 + $0x118] sm:$0xff] %v3379
    %3444 = vst [vmem:[#allocation11 + $0x120] sm:$0xff] %v3380
    %3445 = vst [vmem:[#allocation11 + $0x128] sm:$0xff] %v3381
    %3446 = vst [vmem:[#allocation11 + $0x130] sm:$0xff] %v3382
    %3447 = vst [vmem:[#allocation11 + $0x138] sm:$0xff] %v3383
    %3448 = vst [vmem:[#allocation11 + $0x140] sm:$0xff] %v3384
    %3449 = vst [vmem:[#allocation11 + $0x148] sm:$0xff] %v3385
    %3450 = vst [vmem:[#allocation11 + $0x150] sm:$0xff] %v3386
    %3451 = vst [vmem:[#allocation11 + $0x158] sm:$0xff] %v3387
    %3452 = vst [vmem:[#allocation11 + $0x160] sm:$0xff] %v3388
    %3453 = vst [vmem:[#allocation11 + $0x168] sm:$0xff] %v3389
    %3454 = vst [vmem:[#allocation11 + $0x170] sm:$0xff] %v3390
    %3455 = vst [vmem:[#allocation11 + $0x178] sm:$0xff] %v3391
    %3456 = vst [vmem:[#allocation11 + $0x180] sm:$0xff] %v3392
    %3457 = vst [vmem:[#allocation11 + $0x188] sm:$0xff] %v3393
    %3458 = vst [vmem:[#allocation11 + $0x190] sm:$0xff] %v3394
    %3459 = vst [vmem:[#allocation11 + $0x198] sm:$0xff] %v3395
    %3460 = vst [vmem:[#allocation11 + $0x1a0] sm:$0xff] %v3396
    %3461 = vst [vmem:[#allocation11 + $0x1a8] sm:$0xff] %v3397
    %3462 = vst [vmem:[#allocation11 + $0x1b0] sm:$0xff] %v3398
    %3463 = vst [vmem:[#allocation11 + $0x1b8] sm:$0xff] %v3399
    %3464 = vst [vmem:[#allocation11 + $0x1c0] sm:$0xff] %v3400
    %3465 = vst [vmem:[#allocation11 + $0x1c8] sm:$0xff] %v3401
    %3466 = vst [vmem:[#allocation11 + $0x1d0] sm:$0xff] %v3402
    %3467 = vst [vmem:[#allocation11 + $0x1d8] sm:$0xff] %v3403
    %3468 = vst [vmem:[#allocation11 + $0x1e0] sm:$0xff] %v3404
    %3469 = vst [vmem:[#allocation11 + $0x1e8] sm:$0xff] %v3405
    %3470 = vst [vmem:[#allocation11 + $0x1f0] sm:$0xff] %v3406
    %3471 = vst [vmem:[#allocation11 + $0x1f8] sm:$0xff] %v3407
    // Predicated region
    $region50: #{_lambda_.1} parent=1 // pred_check
      _
    $region51: #{_lambda_.1} parent=1 // pred_check_branch
      %3473 = sbr.rel (0) target = $region53
    $region52: #{_lambda_.1} parent=1 // pred_region
      %s3475 = ssub.s32 8192, 8192
      %3476 = vsyncadd [#allocation4], %s3475
      %s3477 = sshll.u32 [#allocation11], 4
      %s3478 = int_to_ptr.vmem [resolvable:$true] %s3477
      %3483 = dma.vmem_to_hbm [thread:$0]  %s3478, 8192, %s7, [#allocation4], 128, 128, 8
    $region53: #{_lambda_.1} parent=1 // pred_fallthru
      _
    // Predicated region
    $region54: #{_lambda_.1} parent=1 // pred_check
      _
    $region55: #{_lambda_.1} parent=1 // pred_check_branch
      %3485 = sbr.rel (0) target = $region57
    $region56: #{_lambda_.1} parent=1 // pred_region
      %3486 = dma.done [#allocation4], 8192
    $region57: #{_lambda_.1} parent=1 // pred_fallthru
      _
    %3487 = vsyncpa [#allocation3], 1
    %3488 = vsyncpa [#allocation6], 1
    %3489 = vsyncpa [#allocation9], 1
    %3490 = vsyncpa [#allocation4], 1

</llo_original>
